<compile_context>
chip_gen: v5e
topology: v5e:2x2
jax: 0.10.0
libtpu: 0.0.40
codegen_flags: <defaults>
</compile_context>

<pallas_src>
import math
import jax
import jax.numpy as jnp
from jax import lax
from jax.experimental import pallas as pl
from jax.experimental.pallas import tpu as pltpu

# Small, module-consistent sizes.
BATCH, AGENTS = 2, 2          # outer batch, number of agents
T, S = 8, 8                   # target / source (memory) sequence lengths
D, H, DFF = 32, 4, 64         # d_model, heads, feed-forward width
DK = D // H
EPS = 1e-6

PACKED_ORDER = ("vec_slab", "w_qkv0", "b_qkv0", "w_q1", "w_kv1", "b_kv1",
                "wo_h", "w1", "b1", "w2")


# ----------------------------- kernel helpers ------------------------------

def _layernorm(x, a, b):
    # Matches the tbsim LayerNorm: a * (x - mean) / (std + eps) + b, unbiased std.
    mean = jnp.mean(x, axis=-1, keepdims=True)
    xc = x - mean
    var = jnp.sum(xc * xc, axis=-1, keepdims=True) * (1.0 / (x.shape[-1] - 1))
    # exact reciprocal here: LN error would compound through the residual stream
    inv = pl.reciprocal(jnp.sqrt(var) + EPS, approx=False)
    return a * (xc * inv) + b


def _split_heads(x2d, col0, nb, t):
    # [nb*t, >= col0+D] -> [H*nb, t, DK]; head h lives in columns col0 + h*DK.
    # Built from lane slices + a leading-axis stack (no transpose primitives).
    heads = jnp.stack(
        [x2d[:, col0 + h * DK: col0 + (h + 1) * DK] for h in range(H)], axis=0)
    return heads.reshape(H * nb, t, DK)          # (h, b*t + i) -> (h*nb + b, i)


def _mh_attention(qh, kh, vh, add_mask, wo_heads, b_o):
    # qh: [H*nb, t, DK] (already scaled by 1/sqrt(DK) via the packed weights)
    # kh, vh: [H*nb, s, DK];  add_mask: [nb, t, t] or [nb, 1, s] additive {0,-1e9}
    # wo_heads: [H, DK, D] per-head output projection;  b_o: [1, D]
    nb = add_mask.shape[0]
    t, s = qh.shape[1], kh.shape[1]
    # scores for every (head, batch) in one batched matmul: [H*nb, t, s]
    scores = lax.dot_general(qh, kh, (((2,), (2,)), ((0,), (0,))),
                             preferred_element_type=jnp.float32)
    scores = (scores.reshape(H, nb, t, s) + add_mask[None]).reshape(H * nb, t, s)
    # one softmax over all heads/batches
    scores = scores - jnp.max(scores, axis=-1, keepdims=True)
    p = jnp.exp(scores)
    p = p * pl.reciprocal(jnp.sum(p, axis=-1, keepdims=True), approx=True)
    ctx = lax.dot_general(p, vh, (((2,), (1,)), ((0,), (0,))),
                          preferred_element_type=jnp.float32)     # [H*nb, t, DK]
    # output projection: sum_h ctx_h @ wo[h*DK:(h+1)*DK, :] -- no lane concatenate
    ctx = ctx.reshape(H, nb * t, DK)
    out_h = lax.dot_general(ctx, wo_heads, (((2,), (1,)), ((0,), (0,))),
                            preferred_element_type=jnp.float32)   # [H, nb*t, D]
    out = out_h[0]
    for h in range(1, H):
        out = out + out_h[h]
    return out + b_o


# --------------------------------- kernel ----------------------------------

def decoder_layer_kernel(x_ref, m_ref, tgt_add_ref, src_add_ref,
                         vec_ref, w_qkv0_ref, b_qkv0_ref,
                         w_q1_ref, w_kv1_ref, b_kv1_ref,
                         wo_h_ref, w1_ref, b1_ref, w2_ref,
                         out_ref):
    nb = x_ref.shape[0]
    x = x_ref[...].reshape(nb * T, D)            # fold batch-block into rows
    mem = m_ref[...].reshape(nb * S, D)
    tgt_add = tgt_add_ref[...]                   # [nb, T, T] additive mask
    src_add = src_add_ref[...]                   # [nb, 1, S] additive mask
    vec = vec_ref[...]                           # [10, D] packed vector slab

    ln0_a, ln0_b = vec[0:1], vec[1:2]
    ln1_a, ln1_b = vec[2:3], vec[3:4]
    ln2_a, ln2_b = vec[4:5], vec[5:6]
    b_o0, b_o1, b_2, b_q1 = vec[6:7], vec[7:8], vec[8:9], vec[9:10]

    # sublayer 0: x + self_attn(norm(x), norm(x), norm(x), tgt_mask)
    xn = _layernorm(x, ln0_a, ln0_b)
    qkv = jnp.dot(xn, w_qkv0_ref[...],
                  preferred_element_type=jnp.float32) + b_qkv0_ref[...]
    x = x + _mh_attention(_split_heads(qkv, 0, nb, T),
                          _split_heads(qkv, D, nb, T),
                          _split_heads(qkv, 2 * D, nb, T),
                          tgt_add, wo_h_ref[0], b_o0)

    # sublayer 1: x + src_attn(norm(x), memory, memory, src_mask)
    xn = _layernorm(x, ln1_a, ln1_b)
    q = jnp.dot(xn, w_q1_ref[...], preferred_element_type=jnp.float32) + b_q1
    kv = jnp.dot(mem, w_kv1_ref[...],
                 preferred_element_type=jnp.float32) + b_kv1_ref[...]
    x = x + _mh_attention(_split_heads(q, 0, nb, T),
                          _split_heads(kv, 0, nb, S),
                          _split_heads(kv, D, nb, S),
                          src_add, wo_h_ref[1], b_o1)

    # sublayer 2: x + w2(relu(w1(norm(x))))
    xn = _layernorm(x, ln2_a, ln2_b)
    hdn = jnp.maximum(
        jnp.dot(xn, w1_ref[...], preferred_element_type=jnp.float32) + b1_ref[...],
        0.0)
    x = x + jnp.dot(hdn, w2_ref[...], preferred_element_type=jnp.float32) + b_2

    out_ref[...] = x.reshape(nb, T, D)


# ------------------------------ host wrappers ------------------------------

def pack_params(p):
    """Pack the 26 raw DecoderLayer params into 10 slabs; fold 1/sqrt(dk) into Q."""
    scale = 1.0 / math.sqrt(DK)
    return {
        "vec_slab": jnp.concatenate(
            [p["ln0_a"], p["ln0_b"], p["ln1_a"], p["ln1_b"], p["ln2_a"], p["ln2_b"],
             p["bo0"], p["bo1"], p["b2"], p["bq1"] * scale], axis=0),            # [10, D]
        "w_qkv0": jnp.concatenate([p["wq0"] * scale, p["wk0"], p["wv0"]], axis=1),  # [D, 3D]
        "b_qkv0": jnp.concatenate([p["bq0"] * scale, p["bk0"], p["bv0"]], axis=1),  # [1, 3D]
        "w_q1": p["wq1"] * scale,                                                # [D, D]
        "w_kv1": jnp.concatenate([p["wk1"], p["wv1"]], axis=1),                  # [D, 2D]
        "b_kv1": jnp.concatenate([p["bk1"], p["bv1"]], axis=1),                  # [1, 2D]
        "wo_h": jnp.stack([p["wo0"].reshape(H, DK, D),
                           p["wo1"].reshape(H, DK, D)], axis=0),                 # [2, H, DK, D]
        "w1": p["w1"], "b1": p["b1"], "w2": p["w2"],
    }


def _const_spec(shape):
    nd = len(shape)
    return pl.BlockSpec(shape, lambda b, _nd=nd: (0,) * _nd)


def _default_batch_block(n):
    # Collapse the grid to one step on single-TensorCore chips (v5e/v6e); keep a
    # parallel grid elsewhere (v7x has 2 TCs, v3/v4/v5p have megacore).
    try:
        kind = jax.devices()[0].device_kind.lower()
    except Exception:
        return 1
    single_tc = any(tag in kind for tag in
                    ("v5 lite", "v5e", "v5lite", "v6 lite", "v6e", "v6lite"))
    return n if single_tc else 1


def decoder_layer_pallas(x, memory, tgt_add, src_add, packed, batch_block=None):
    """One DecoderLayer forward on flattened [N, T, D] inputs."""
    n = x.shape[0]
    nb = batch_block if batch_block is not None else _default_batch_block(n)
    assert n % nb == 0
    data_specs = [
        pl.BlockSpec((nb, T, D), lambda b: (b, 0, 0)),   # x
        pl.BlockSpec((nb, S, D), lambda b: (b, 0, 0)),   # memory
        pl.BlockSpec((nb, T, T), lambda b: (b, 0, 0)),   # additive tgt mask
        pl.BlockSpec((nb, 1, S), lambda b: (b, 0, 0)),   # additive src mask
    ]
    param_list = [packed[k] for k in PACKED_ORDER]
    param_specs = [_const_spec(p.shape) for p in param_list]
    return pl.pallas_call(
        decoder_layer_kernel,
        out_shape=jax.ShapeDtypeStruct((n, T, D), jnp.float32),
        grid_spec=pltpu.PrefetchScalarGridSpec(
            num_scalar_prefetch=0,
            grid=(n // nb,),
            in_specs=data_specs + param_specs,
            out_specs=pl.BlockSpec((nb, T, D), lambda b: (b, 0, 0)),
        ),
        compiler_params=pltpu.CompilerParams(
            dimension_semantics=("parallel",)),
    )(x, memory, tgt_add, src_add, *param_list)


def factorized_decoder(x, memory, src_mask, tgt_mask, tgt_mask_agent, params,
                       n_layer_dec=1, batch_block=None):
    """FactorizedDecoder.forward (eval mode).

    x:              [batch, A, T, D]   (already at d_model)
    memory:         [batch, A, S, D]
    src_mask:       [batch, A, S]      (1 = attend)
    tgt_mask:       [batch, A, T, T]   (full self-attn mask per agent, e.g. causal)
    tgt_mask_agent: [batch, A, T]      (1 = valid)
    """
    # TODO(synk): the XY_pe / temporal_pe positional-encoding concat of the original
    # module depends on external modules not given in the spec; `x` is assumed to
    # already be embedded at d_model.
    batch, agents = x.shape[0], x.shape[1]
    n = batch * agents
    packed = pack_params(params)
    xm = (x * tgt_mask_agent[..., None]).reshape(n, T, D)
    mem = memory.reshape(n, S, D)
    # additive attention masks (0 where attended, -1e9 where masked)
    tgt_add = (tgt_mask.reshape(n, T, T) - 1.0) * 1e9
    src_add = (src_mask.reshape(n, 1, S) - 1.0) * 1e9
    y = xm
    for _ in range(n_layer_dec):
        y = decoder_layer_pallas(y, mem, tgt_add, src_add, packed,
                                 batch_block=batch_block)
    out = y.reshape(batch, agents, T, D) * tgt_mask_agent[..., None]
    prob = jnp.ones((batch,), jnp.float32)
    return out, prob


# ------------------------------ JAX reference ------------------------------

def _reference(x, memory, src_mask, tgt_mask, tgt_mask_agent, p, n_layer_dec=1):
    """Pure-JAX mirror of the PyTorch module (per-head, masked_fill-style)."""
    def ln(z, a, b):
        mean = z.mean(-1, keepdims=True)
        std = jnp.sqrt(((z - mean) ** 2).sum(-1, keepdims=True) / (z.shape[-1] - 1))
        return a * (z - mean) / (std + EPS) + b

    def mha(q_in, k_in, v_in, mask, wq, bq, wk, bk, wv, bv, wo, bo):
        q = q_in @ wq + bq
        k = k_in @ wk + bk
        v = v_in @ wv + bv
        outs = []
        for h in range(H):
            sl = slice(h * DK, (h + 1) * DK)
            sc = (q[:, sl] @ k[:, sl].T) / math.sqrt(DK)
            sc = jnp.where(mask == 0.0, -1e9, sc)
            outs.append(jax.nn.softmax(sc, axis=-1) @ v[:, sl])
        return jnp.concatenate(outs, axis=-1) @ wo + bo

    def layer(xb, mb, tm, sm):
        xn = ln(xb, p["ln0_a"], p["ln0_b"])
        xb = xb + mha(xn, xn, xn, tm, p["wq0"], p["bq0"], p["wk0"], p["bk0"],
                      p["wv0"], p["bv0"], p["wo0"], p["bo0"])
        xn = ln(xb, p["ln1_a"], p["ln1_b"])
        xb = xb + mha(xn, mb, mb, sm, p["wq1"], p["bq1"], p["wk1"], p["bk1"],
                      p["wv1"], p["bv1"], p["wo1"], p["bo1"])
        xn = ln(xb, p["ln2_a"], p["ln2_b"])
        hdn = jnp.maximum(xn @ p["w1"] + p["b1"], 0.0)
        return xb + hdn @ p["w2"] + p["b2"]

    batch, agents = x.shape[0], x.shape[1]
    n = batch * agents
    xf = (x * tgt_mask_agent[..., None]).reshape(n, T, D)
    mf = memory.reshape(n, S, D)
    tm = tgt_mask.reshape(n, T, T)
    sm = src_mask.reshape(n, 1, S)
    for _ in range(n_layer_dec):
        xf = jnp.stack([layer(xf[i], mf[i], tm[i], sm[i]) for i in range(n)], axis=0)
    out = xf.reshape(batch, agents, T, D) * tgt_mask_agent[..., None]
    return out, jnp.ones((batch,), jnp.float32)


def _init_params(key):
    params = {}
    for i in range(3):
        params[f"ln{i}_a"] = jnp.ones((1, D), jnp.float32)
        params[f"ln{i}_b"] = jnp.zeros((1, D), jnp.float32)
    shapes = {
        "wq0": (D, D), "bq0": (1, D), "wk0": (D, D), "bk0": (1, D),
        "wv0": (D, D), "bv0": (1, D), "wo0": (D, D), "bo0": (1, D),
        "wq1": (D, D), "bq1": (1, D), "wk1": (D, D), "bk1": (1, D),
        "wv1": (D, D), "bv1": (1, D), "wo1": (D, D), "bo1": (1, D),
        "w1": (D, DFF), "b1": (1, DFF), "w2": (DFF, D), "b2": (1, D),
    }
    keys = jax.random.split(key, len(shapes))
    for k, (name, shape) in zip(keys, shapes.items()):
        params[name] = (0.1 * jax.random.normal(k, shape)).astype(jnp.float32)
    return params


if __name__ == "__main__":
    key = jax.random.PRNGKey(0)
    kx, km, kp = jax.random.split(key, 3)

    x = jax.random.normal(kx, (BATCH, AGENTS, T, D), jnp.float32)
    memory = jax.random.normal(km, (BATCH, AGENTS, S, D), jnp.float32)
    # causal self-attn mask per agent, padded source, last agent padded at the end
    tgt_mask = jnp.broadcast_to(jnp.tril(jnp.ones((T, T), jnp.float32)),
                                (BATCH, AGENTS, T, T))
    src_mask = jnp.ones((BATCH, AGENTS, S), jnp.float32).at[:, :, -1].set(0.0)
    tgt_mask_agent = jnp.ones((BATCH, AGENTS, T), jnp.float32).at[:, -1, -2:].set(0.0)

    params = _init_params(kp)

    out, prob = factorized_decoder(x, memory, src_mask, tgt_mask, tgt_mask_agent,
                                   params)
    out = jax.block_until_ready(out)

    ref_out, ref_prob = _reference(x, memory, src_mask, tgt_mask, tgt_mask_agent,
                                   params)
    assert out.shape == (BATCH, AGENTS, T, D)
    assert prob.shape == (BATCH,)
    assert jnp.allclose(prob, ref_prob)
    max_err = float(jnp.max(jnp.abs(out - ref_out)))
    # tolerance is 2e-3 (not 1e-4) solely because the softmax denominators use the
    # EUP approximate reciprocal (pl.reciprocal(approx=True)); all other math is f32.
    assert jnp.allclose(out, ref_out, atol=2e-3, rtol=2e-3), \
        f"mismatch vs JAX reference (max abs err {max_err})"

    print("KERNEL_OK")
</pallas_src>

<mosaic_0001>
module attributes {stable_mosaic.version = 11 : i64} {
  func.func @decoder_layer_kernel(%arg0: i32, %arg1: memref<1x8x32xf32, #tpu.memory_space<vmem>>, %arg2: memref<1x8x32xf32, #tpu.memory_space<vmem>>, %arg3: memref<1x8x8xf32, #tpu.memory_space<vmem>>, %arg4: memref<1x1x8xf32, #tpu.memory_space<vmem>>, %arg5: memref<10x32xf32, #tpu.memory_space<vmem>>, %arg6: memref<32x96xf32, #tpu.memory_space<vmem>>, %arg7: memref<1x96xf32, #tpu.memory_space<vmem>>, %arg8: memref<32x32xf32, #tpu.memory_space<vmem>>, %arg9: memref<32x64xf32, #tpu.memory_space<vmem>>, %arg10: memref<1x64xf32, #tpu.memory_space<vmem>>, %arg11: memref<2x4x8x32xf32, #tpu.memory_space<vmem>>, %arg12: memref<32x64xf32, #tpu.memory_space<vmem>>, %arg13: memref<1x64xf32, #tpu.memory_space<vmem>>, %arg14: memref<64x32xf32, #tpu.memory_space<vmem>>, %arg15: memref<1x8x32xf32, #tpu.memory_space<vmem>>) attributes {dimension_semantics = [#tpu.dimension_semantics<parallel>], iteration_bounds = array<i64: 4>, scalar_prefetch = 0 : i64, scratch_operands = 0 : i64, tpu.core_type = #tpu.core_type<tc>, window_params = [{transform_indices = @transform_0, window_bounds = array<i64: 1, 8, 32>}, {transform_indices = @transform_1, window_bounds = array<i64: 1, 8, 32>}, {transform_indices = @transform_2, window_bounds = array<i64: 1, 8, 8>}, {transform_indices = @transform_3, window_bounds = array<i64: 1, 1, 8>}, {pipeline_mode = #tpu.pipeline_mode<synchronous>, transform_indices = @transform_4, window_bounds = array<i64: 10, 32>}, {pipeline_mode = #tpu.pipeline_mode<synchronous>, transform_indices = @transform_5, window_bounds = array<i64: 32, 96>}, {pipeline_mode = #tpu.pipeline_mode<synchronous>, transform_indices = @transform_6, window_bounds = array<i64: 1, 96>}, {pipeline_mode = #tpu.pipeline_mode<synchronous>, transform_indices = @transform_7, window_bounds = array<i64: 32, 32>}, {pipeline_mode = #tpu.pipeline_mode<synchronous>, transform_indices = @transform_8, window_bounds = array<i64: 32, 64>}, {pipeline_mode = #tpu.pipeline_mode<synchronous>, transform_indices = @transform_9, window_bounds = array<i64: 1, 64>}, {pipeline_mode = #tpu.pipeline_mode<synchronous>, transform_indices = @transform_10, window_bounds = array<i64: 2, 4, 8, 32>}, {pipeline_mode = #tpu.pipeline_mode<synchronous>, transform_indices = @transform_11, window_bounds = array<i64: 32, 64>}, {pipeline_mode = #tpu.pipeline_mode<synchronous>, transform_indices = @transform_12, window_bounds = array<i64: 1, 64>}, {pipeline_mode = #tpu.pipeline_mode<synchronous>, transform_indices = @transform_13, window_bounds = array<i64: 64, 32>}, {transform_indices = @transform_14, window_bounds = array<i64: 1, 8, 32>}]} {
    %c0 = arith.constant 0 : index
    %c0_0 = arith.constant 0 : index
    %c0_1 = arith.constant 0 : index
    %0 = vector.load %arg1[%c0, %c0_0, %c0_1] : memref<1x8x32xf32, #tpu.memory_space<vmem>>, vector<1x8x32xf32>
    %1 = vector.shape_cast %0 : vector<1x8x32xf32> to vector<8x32xf32>
    %c0_2 = arith.constant 0 : index
    %c0_3 = arith.constant 0 : index
    %c0_4 = arith.constant 0 : index
    %2 = vector.load %arg2[%c0_2, %c0_3, %c0_4] : memref<1x8x32xf32, #tpu.memory_space<vmem>>, vector<1x8x32xf32>
    %3 = vector.shape_cast %2 : vector<1x8x32xf32> to vector<8x32xf32>
    %c0_5 = arith.constant 0 : index
    %c0_6 = arith.constant 0 : index
    %c0_7 = arith.constant 0 : index
    %4 = vector.load %arg3[%c0_5, %c0_6, %c0_7] : memref<1x8x8xf32, #tpu.memory_space<vmem>>, vector<1x8x8xf32>
    %c0_8 = arith.constant 0 : index
    %c0_9 = arith.constant 0 : index
    %c0_10 = arith.constant 0 : index
    %5 = vector.load %arg4[%c0_8, %c0_9, %c0_10] : memref<1x1x8xf32, #tpu.memory_space<vmem>>, vector<1x1x8xf32>
    %c0_11 = arith.constant 0 : index
    %c0_12 = arith.constant 0 : index
    %6 = vector.load %arg5[%c0_11, %c0_12] : memref<10x32xf32, #tpu.memory_space<vmem>>, vector<10x32xf32>
    %7 = vector.extract_strided_slice %6 {offsets = [0, 0], sizes = [1, 32], strides = [1, 1]} : vector<10x32xf32> to vector<1x32xf32>
    %8 = vector.extract_strided_slice %6 {offsets = [1, 0], sizes = [1, 32], strides = [1, 1]} : vector<10x32xf32> to vector<1x32xf32>
    %9 = vector.extract_strided_slice %6 {offsets = [2, 0], sizes = [1, 32], strides = [1, 1]} : vector<10x32xf32> to vector<1x32xf32>
    %10 = vector.extract_strided_slice %6 {offsets = [3, 0], sizes = [1, 32], strides = [1, 1]} : vector<10x32xf32> to vector<1x32xf32>
    %11 = vector.extract_strided_slice %6 {offsets = [4, 0], sizes = [1, 32], strides = [1, 1]} : vector<10x32xf32> to vector<1x32xf32>
    %12 = vector.extract_strided_slice %6 {offsets = [5, 0], sizes = [1, 32], strides = [1, 1]} : vector<10x32xf32> to vector<1x32xf32>
    %13 = vector.extract_strided_slice %6 {offsets = [6, 0], sizes = [1, 32], strides = [1, 1]} : vector<10x32xf32> to vector<1x32xf32>
    %14 = vector.extract_strided_slice %6 {offsets = [7, 0], sizes = [1, 32], strides = [1, 1]} : vector<10x32xf32> to vector<1x32xf32>
    %15 = vector.extract_strided_slice %6 {offsets = [8, 0], sizes = [1, 32], strides = [1, 1]} : vector<10x32xf32> to vector<1x32xf32>
    %16 = vector.extract_strided_slice %6 {offsets = [9, 0], sizes = [1, 32], strides = [1, 1]} : vector<10x32xf32> to vector<1x32xf32>
    %cst = arith.constant dense<0.000000e+00> : vector<8xf32>
    %17 = vector.multi_reduction <add>, %1, %cst [1] : vector<8x32xf32> to vector<8xf32>
    %18 = vector.shape_cast %17 : vector<8xf32> to vector<8x1xf32>
    %cst_13 = arith.constant 3.200000e+01 : f32
    %19 = vector.broadcast %cst_13 : f32 to vector<8x1xf32>
    %20 = arith.divf %18, %19 : vector<8x1xf32>
    %21 = vector.broadcast %20 : vector<8x1xf32> to vector<8x32xf32>
    %22 = arith.subf %1, %21 : vector<8x32xf32>
    %23 = arith.mulf %22, %22 : vector<8x32xf32>
    %cst_14 = arith.constant dense<0.000000e+00> : vector<8xf32>
    %24 = vector.multi_reduction <add>, %23, %cst_14 [1] : vector<8x32xf32> to vector<8xf32>
    %25 = vector.shape_cast %24 : vector<8xf32> to vector<8x1xf32>
    %cst_15 = arith.constant 0.0322580636 : f32
    %26 = vector.broadcast %cst_15 : f32 to vector<8x1xf32>
    %27 = arith.mulf %25, %26 : vector<8x1xf32>
    %28 = math.sqrt %27 : vector<8x1xf32>
    %cst_16 = arith.constant 9.99999997E-7 : f32
    %29 = vector.broadcast %cst_16 : f32 to vector<8x1xf32>
    %30 = arith.addf %28, %29 : vector<8x1xf32>
    %31 = tpu.reciprocal %30 : vector<8x1xf32> -> vector<8x1xf32>
    %32 = vector.broadcast %31 : vector<8x1xf32> to vector<8x32xf32>
    %33 = arith.mulf %22, %32 : vector<8x32xf32>
    %34 = vector.broadcast %7 : vector<1x32xf32> to vector<8x32xf32>
    %35 = arith.mulf %34, %33 : vector<8x32xf32>
    %36 = vector.broadcast %8 : vector<1x32xf32> to vector<8x32xf32>
    %37 = arith.addf %35, %36 : vector<8x32xf32>
    %c0_17 = arith.constant 0 : index
    %c0_18 = arith.constant 0 : index
    %38 = vector.load %arg6[%c0_17, %c0_18] : memref<32x96xf32, #tpu.memory_space<vmem>>, vector<32x96xf32>
    %cst_19 = arith.constant dense<0.000000e+00> : vector<8x96xf32>
    %39 = tpu.matmul %37, %38, %cst_19 {dimension_numbers = #tpu.dot_dimension_numbers<[1], [0], [0], [1], [0, 0, 1, 1], [], []>} : vector<8x32xf32>, vector<32x96xf32>, vector<8x96xf32> -> vector<8x96xf32>
    %c0_20 = arith.constant 0 : index
    %c0_21 = arith.constant 0 : index
    %40 = vector.load %arg7[%c0_20, %c0_21] : memref<1x96xf32, #tpu.memory_space<vmem>>, vector<1x96xf32>
    %41 = vector.broadcast %40 : vector<1x96xf32> to vector<8x96xf32>
    %42 = arith.addf %39, %41 : vector<8x96xf32>
    %43 = vector.extract_strided_slice %42 {offsets = [0, 0], sizes = [8, 8], strides = [1, 1]} : vector<8x96xf32> to vector<8x8xf32>
    %44 = vector.extract_strided_slice %42 {offsets = [0, 8], sizes = [8, 8], strides = [1, 1]} : vector<8x96xf32> to vector<8x8xf32>
    %45 = vector.extract_strided_slice %42 {offsets = [0, 16], sizes = [8, 8], strides = [1, 1]} : vector<8x96xf32> to vector<8x8xf32>
    %46 = vector.extract_strided_slice %42 {offsets = [0, 24], sizes = [8, 8], strides = [1, 1]} : vector<8x96xf32> to vector<8x8xf32>
    %47 = vector.shape_cast %43 : vector<8x8xf32> to vector<1x8x8xf32>
    %48 = vector.shape_cast %44 : vector<8x8xf32> to vector<1x8x8xf32>
    %49 = vector.shape_cast %45 : vector<8x8xf32> to vector<1x8x8xf32>
    %50 = vector.shape_cast %46 : vector<8x8xf32> to vector<1x8x8xf32>
    %51 = tpu.concatenate %47, %48, %49, %50 in 0 : vector<1x8x8xf32>, vector<1x8x8xf32>, vector<1x8x8xf32>, vector<1x8x8xf32> -> vector<4x8x8xf32>
    %52 = vector.extract_strided_slice %42 {offsets = [0, 32], sizes = [8, 8], strides = [1, 1]} : vector<8x96xf32> to vector<8x8xf32>
    %53 = vector.extract_strided_slice %42 {offsets = [0, 40], sizes = [8, 8], strides = [1, 1]} : vector<8x96xf32> to vector<8x8xf32>
    %54 = vector.extract_strided_slice %42 {offsets = [0, 48], sizes = [8, 8], strides = [1, 1]} : vector<8x96xf32> to vector<8x8xf32>
    %55 = vector.extract_strided_slice %42 {offsets = [0, 56], sizes = [8, 8], strides = [1, 1]} : vector<8x96xf32> to vector<8x8xf32>
    %56 = vector.shape_cast %52 : vector<8x8xf32> to vector<1x8x8xf32>
    %57 = vector.shape_cast %53 : vector<8x8xf32> to vector<1x8x8xf32>
    %58 = vector.shape_cast %54 : vector<8x8xf32> to vector<1x8x8xf32>
    %59 = vector.shape_cast %55 : vector<8x8xf32> to vector<1x8x8xf32>
    %60 = tpu.concatenate %56, %57, %58, %59 in 0 : vector<1x8x8xf32>, vector<1x8x8xf32>, vector<1x8x8xf32>, vector<1x8x8xf32> -> vector<4x8x8xf32>
    %61 = vector.extract_strided_slice %42 {offsets = [0, 64], sizes = [8, 8], strides = [1, 1]} : vector<8x96xf32> to vector<8x8xf32>
    %62 = vector.extract_strided_slice %42 {offsets = [0, 72], sizes = [8, 8], strides = [1, 1]} : vector<8x96xf32> to vector<8x8xf32>
    %63 = vector.extract_strided_slice %42 {offsets = [0, 80], sizes = [8, 8], strides = [1, 1]} : vector<8x96xf32> to vector<8x8xf32>
    %64 = vector.extract_strided_slice %42 {offsets = [0, 88], sizes = [8, 8], strides = [1, 1]} : vector<8x96xf32> to vector<8x8xf32>
    %65 = vector.shape_cast %61 : vector<8x8xf32> to vector<1x8x8xf32>
    %66 = vector.shape_cast %62 : vector<8x8xf32> to vector<1x8x8xf32>
    %67 = vector.shape_cast %63 : vector<8x8xf32> to vector<1x8x8xf32>
    %68 = vector.shape_cast %64 : vector<8x8xf32> to vector<1x8x8xf32>
    %69 = tpu.concatenate %65, %66, %67, %68 in 0 : vector<1x8x8xf32>, vector<1x8x8xf32>, vector<1x8x8xf32>, vector<1x8x8xf32> -> vector<4x8x8xf32>
    %c0_22 = arith.constant 0 : index
    %c0_23 = arith.constant 0 : index
    %c0_24 = arith.constant 0 : index
    %c0_25 = arith.constant 0 : index
    %70 = vector.load %arg11[%c0_22, %c0_23, %c0_24, %c0_25] : memref<2x4x8x32xf32, #tpu.memory_space<vmem>>, vector<1x4x8x32xf32>
    %71 = vector.shape_cast %70 : vector<1x4x8x32xf32> to vector<4x8x32xf32>
    %cst_26 = arith.constant dense<0.000000e+00> : vector<4x8x8xf32>
    %72 = tpu.matmul %51, %60, %cst_26 {dimension_numbers = #tpu.dot_dimension_numbers<[2], [2], [1], [1], [0, 0, 0, 1, 1, 1], [0], [0]>} : vector<4x8x8xf32>, vector<4x8x8xf32>, vector<4x8x8xf32> -> vector<4x8x8xf32>
    %73 = vector.shape_cast %72 : vector<4x8x8xf32> to vector<4x1x8x8xf32>
    %74 = vector.shape_cast %4 : vector<1x8x8xf32> to vector<1x1x8x8xf32>
    %75 = vector.broadcast %74 : vector<1x1x8x8xf32> to vector<4x1x8x8xf32>
    %76 = arith.addf %73, %75 : vector<4x1x8x8xf32>
    %77 = vector.shape_cast %76 : vector<4x1x8x8xf32> to vector<4x8x8xf32>
    %cst_27 = arith.constant dense<0xFF800000> : vector<4x8xf32>
    %78 = vector.multi_reduction <maximumf>, %77, %cst_27 [2] : vector<4x8x8xf32> to vector<4x8xf32>
    %79 = vector.shape_cast %78 : vector<4x8xf32> to vector<4x8x1xf32>
    %80 = vector.broadcast %79 : vector<4x8x1xf32> to vector<4x8x8xf32>
    %81 = arith.subf %77, %80 : vector<4x8x8xf32>
    %82 = math.exp %81 : vector<4x8x8xf32>
    %cst_28 = arith.constant dense<0.000000e+00> : vector<4x8xf32>
    %83 = vector.multi_reduction <add>, %82, %cst_28 [2] : vector<4x8x8xf32> to vector<4x8xf32>
    %84 = vector.shape_cast %83 : vector<4x8xf32> to vector<4x8x1xf32>
    %85 = tpu.reciprocal %84 {approx = true} : vector<4x8x1xf32> -> vector<4x8x1xf32>
    %86 = vector.broadcast %85 : vector<4x8x1xf32> to vector<4x8x8xf32>
    %87 = arith.mulf %82, %86 : vector<4x8x8xf32>
    %cst_29 = arith.constant dense<0.000000e+00> : vector<4x8x8xf32>
    %88 = tpu.matmul %87, %69, %cst_29 {dimension_numbers = #tpu.dot_dimension_numbers<[2], [1], [1], [2], [0, 0, 0, 1, 1, 2], [0], [0]>} : vector<4x8x8xf32>, vector<4x8x8xf32>, vector<4x8x8xf32> -> vector<4x8x8xf32>
    %cst_30 = arith.constant dense<0.000000e+00> : vector<4x8x32xf32>
    %89 = tpu.matmul %88, %71, %cst_30 {dimension_numbers = #tpu.dot_dimension_numbers<[2], [1], [1], [2], [0, 0, 0, 1, 1, 2], [0], [0]>} : vector<4x8x8xf32>, vector<4x8x32xf32>, vector<4x8x32xf32> -> vector<4x8x32xf32>
    %90 = vector.extract_strided_slice %89 {offsets = [0, 0, 0], sizes = [1, 8, 32], strides = [1, 1, 1]} : vector<4x8x32xf32> to vector<1x8x32xf32>
    %91 = vector.shape_cast %90 : vector<1x8x32xf32> to vector<8x32xf32>
    %92 = vector.extract_strided_slice %89 {offsets = [1, 0, 0], sizes = [1, 8, 32], strides = [1, 1, 1]} : vector<4x8x32xf32> to vector<1x8x32xf32>
    %93 = vector.shape_cast %92 : vector<1x8x32xf32> to vector<8x32xf32>
    %94 = arith.addf %91, %93 : vector<8x32xf32>
    %95 = vector.extract_strided_slice %89 {offsets = [2, 0, 0], sizes = [1, 8, 32], strides = [1, 1, 1]} : vector<4x8x32xf32> to vector<1x8x32xf32>
    %96 = vector.shape_cast %95 : vector<1x8x32xf32> to vector<8x32xf32>
    %97 = arith.addf %94, %96 : vector<8x32xf32>
    %98 = vector.extract_strided_slice %89 {offsets = [3, 0, 0], sizes = [1, 8, 32], strides = [1, 1, 1]} : vector<4x8x32xf32> to vector<1x8x32xf32>
    %99 = vector.shape_cast %98 : vector<1x8x32xf32> to vector<8x32xf32>
    %100 = arith.addf %97, %99 : vector<8x32xf32>
    %101 = vector.broadcast %13 : vector<1x32xf32> to vector<8x32xf32>
    %102 = arith.addf %100, %101 : vector<8x32xf32>
    %103 = arith.addf %1, %102 : vector<8x32xf32>
    %cst_31 = arith.constant dense<0.000000e+00> : vector<8xf32>
    %104 = vector.multi_reduction <add>, %103, %cst_31 [1] : vector<8x32xf32> to vector<8xf32>
    %105 = vector.shape_cast %104 : vector<8xf32> to vector<8x1xf32>
    %cst_32 = arith.constant 3.200000e+01 : f32
    %106 = vector.broadcast %cst_32 : f32 to vector<8x1xf32>
    %107 = arith.divf %105, %106 : vector<8x1xf32>
    %108 = vector.broadcast %107 : vector<8x1xf32> to vector<8x32xf32>
    %109 = arith.subf %103, %108 : vector<8x32xf32>
    %110 = arith.mulf %109, %109 : vector<8x32xf32>
    %cst_33 = arith.constant dense<0.000000e+00> : vector<8xf32>
    %111 = vector.multi_reduction <add>, %110, %cst_33 [1] : vector<8x32xf32> to vector<8xf32>
    %112 = vector.shape_cast %111 : vector<8xf32> to vector<8x1xf32>
    %cst_34 = arith.constant 0.0322580636 : f32
    %113 = vector.broadcast %cst_34 : f32 to vector<8x1xf32>
    %114 = arith.mulf %112, %113 : vector<8x1xf32>
    %115 = math.sqrt %114 : vector<8x1xf32>
    %cst_35 = arith.constant 9.99999997E-7 : f32
    %116 = vector.broadcast %cst_35 : f32 to vector<8x1xf32>
    %117 = arith.addf %115, %116 : vector<8x1xf32>
    %118 = tpu.reciprocal %117 : vector<8x1xf32> -> vector<8x1xf32>
    %119 = vector.broadcast %118 : vector<8x1xf32> to vector<8x32xf32>
    %120 = arith.mulf %109, %119 : vector<8x32xf32>
    %121 = vector.broadcast %9 : vector<1x32xf32> to vector<8x32xf32>
    %122 = arith.mulf %121, %120 : vector<8x32xf32>
    %123 = vector.broadcast %10 : vector<1x32xf32> to vector<8x32xf32>
    %124 = arith.addf %122, %123 : vector<8x32xf32>
    %c0_36 = arith.constant 0 : index
    %c0_37 = arith.constant 0 : index
    %125 = vector.load %arg8[%c0_36, %c0_37] : memref<32x32xf32, #tpu.memory_space<vmem>>, vector<32x32xf32>
    %cst_38 = arith.constant dense<0.000000e+00> : vector<8x32xf32>
    %126 = tpu.matmul %124, %125, %cst_38 {dimension_numbers = #tpu.dot_dimension_numbers<[1], [0], [0], [1], [0, 0, 1, 1], [], []>} : vector<8x32xf32>, vector<32x32xf32>, vector<8x32xf32> -> vector<8x32xf32>
    %127 = vector.broadcast %16 : vector<1x32xf32> to vector<8x32xf32>
    %128 = arith.addf %126, %127 : vector<8x32xf32>
    %c0_39 = arith.constant 0 : index
    %c0_40 = arith.constant 0 : index
    %129 = vector.load %arg9[%c0_39, %c0_40] : memref<32x64xf32, #tpu.memory_space<vmem>>, vector<32x64xf32>
    %cst_41 = arith.constant dense<0.000000e+00> : vector<8x64xf32>
    %130 = tpu.matmul %3, %129, %cst_41 {dimension_numbers = #tpu.dot_dimension_numbers<[1], [0], [0], [1], [0, 0, 1, 1], [], []>} : vector<8x32xf32>, vector<32x64xf32>, vector<8x64xf32> -> vector<8x64xf32>
    %c0_42 = arith.constant 0 : index
    %c0_43 = arith.constant 0 : index
    %131 = vector.load %arg10[%c0_42, %c0_43] : memref<1x64xf32, #tpu.memory_space<vmem>>, vector<1x64xf32>
    %132 = vector.broadcast %131 : vector<1x64xf32> to vector<8x64xf32>
    %133 = arith.addf %130, %132 : vector<8x64xf32>
    %134 = vector.extract_strided_slice %128 {offsets = [0, 0], sizes = [8, 8], strides = [1, 1]} : vector<8x32xf32> to vector<8x8xf32>
    %135 = vector.extract_strided_slice %128 {offsets = [0, 8], sizes = [8, 8], strides = [1, 1]} : vector<8x32xf32> to vector<8x8xf32>
    %136 = vector.extract_strided_slice %128 {offsets = [0, 16], sizes = [8, 8], strides = [1, 1]} : vector<8x32xf32> to vector<8x8xf32>
    %137 = vector.extract_strided_slice %128 {offsets = [0, 24], sizes = [8, 8], strides = [1, 1]} : vector<8x32xf32> to vector<8x8xf32>
    %138 = vector.shape_cast %134 : vector<8x8xf32> to vector<1x8x8xf32>
    %139 = vector.shape_cast %135 : vector<8x8xf32> to vector<1x8x8xf32>
    %140 = vector.shape_cast %136 : vector<8x8xf32> to vector<1x8x8xf32>
    %141 = vector.shape_cast %137 : vector<8x8xf32> to vector<1x8x8xf32>
    %142 = tpu.concatenate %138, %139, %140, %141 in 0 : vector<1x8x8xf32>, vector<1x8x8xf32>, vector<1x8x8xf32>, vector<1x8x8xf32> -> vector<4x8x8xf32>
    %143 = vector.extract_strided_slice %133 {offsets = [0, 0], sizes = [8, 8], strides = [1, 1]} : vector<8x64xf32> to vector<8x8xf32>
    %144 = vector.extract_strided_slice %133 {offsets = [0, 8], sizes = [8, 8], strides = [1, 1]} : vector<8x64xf32> to vector<8x8xf32>
    %145 = vector.extract_strided_slice %133 {offsets = [0, 16], sizes = [8, 8], strides = [1, 1]} : vector<8x64xf32> to vector<8x8xf32>
    %146 = vector.extract_strided_slice %133 {offsets = [0, 24], sizes = [8, 8], strides = [1, 1]} : vector<8x64xf32> to vector<8x8xf32>
    %147 = vector.shape_cast %143 : vector<8x8xf32> to vector<1x8x8xf32>
    %148 = vector.shape_cast %144 : vector<8x8xf32> to vector<1x8x8xf32>
    %149 = vector.shape_cast %145 : vector<8x8xf32> to vector<1x8x8xf32>
    %150 = vector.shape_cast %146 : vector<8x8xf32> to vector<1x8x8xf32>
    %151 = tpu.concatenate %147, %148, %149, %150 in 0 : vector<1x8x8xf32>, vector<1x8x8xf32>, vector<1x8x8xf32>, vector<1x8x8xf32> -> vector<4x8x8xf32>
    %152 = vector.extract_strided_slice %133 {offsets = [0, 32], sizes = [8, 8], strides = [1, 1]} : vector<8x64xf32> to vector<8x8xf32>
    %153 = vector.extract_strided_slice %133 {offsets = [0, 40], sizes = [8, 8], strides = [1, 1]} : vector<8x64xf32> to vector<8x8xf32>
    %154 = vector.extract_strided_slice %133 {offsets = [0, 48], sizes = [8, 8], strides = [1, 1]} : vector<8x64xf32> to vector<8x8xf32>
    %155 = vector.extract_strided_slice %133 {offsets = [0, 56], sizes = [8, 8], strides = [1, 1]} : vector<8x64xf32> to vector<8x8xf32>
    %156 = vector.shape_cast %152 : vector<8x8xf32> to vector<1x8x8xf32>
    %157 = vector.shape_cast %153 : vector<8x8xf32> to vector<1x8x8xf32>
    %158 = vector.shape_cast %154 : vector<8x8xf32> to vector<1x8x8xf32>
    %159 = vector.shape_cast %155 : vector<8x8xf32> to vector<1x8x8xf32>
    %160 = tpu.concatenate %156, %157, %158, %159 in 0 : vector<1x8x8xf32>, vector<1x8x8xf32>, vector<1x8x8xf32>, vector<1x8x8xf32> -> vector<4x8x8xf32>
    %c1 = arith.constant 1 : index
    %c0_44 = arith.constant 0 : index
    %c0_45 = arith.constant 0 : index
    %c0_46 = arith.constant 0 : index
    %161 = vector.load %arg11[%c1, %c0_44, %c0_45, %c0_46] : memref<2x4x8x32xf32, #tpu.memory_space<vmem>>, vector<1x4x8x32xf32>
    %162 = vector.shape_cast %161 : vector<1x4x8x32xf32> to vector<4x8x32xf32>
    %cst_47 = arith.constant dense<0.000000e+00> : vector<4x8x8xf32>
    %163 = tpu.matmul %142, %151, %cst_47 {dimension_numbers = #tpu.dot_dimension_numbers<[2], [2], [1], [1], [0, 0, 0, 1, 1, 1], [0], [0]>} : vector<4x8x8xf32>, vector<4x8x8xf32>, vector<4x8x8xf32> -> vector<4x8x8xf32>
    %164 = vector.shape_cast %163 : vector<4x8x8xf32> to vector<4x1x8x8xf32>
    %165 = vector.shape_cast %5 : vector<1x1x8xf32> to vector<1x1x1x8xf32>
    %166 = vector.broadcast %165 : vector<1x1x1x8xf32> to vector<4x1x8x8xf32>
    %167 = arith.addf %164, %166 : vector<4x1x8x8xf32>
    %168 = vector.shape_cast %167 : vector<4x1x8x8xf32> to vector<4x8x8xf32>
    %cst_48 = arith.constant dense<0xFF800000> : vector<4x8xf32>
    %169 = vector.multi_reduction <maximumf>, %168, %cst_48 [2] : vector<4x8x8xf32> to vector<4x8xf32>
    %170 = vector.shape_cast %169 : vector<4x8xf32> to vector<4x8x1xf32>
    %171 = vector.broadcast %170 : vector<4x8x1xf32> to vector<4x8x8xf32>
    %172 = arith.subf %168, %171 : vector<4x8x8xf32>
    %173 = math.exp %172 : vector<4x8x8xf32>
    %cst_49 = arith.constant dense<0.000000e+00> : vector<4x8xf32>
    %174 = vector.multi_reduction <add>, %173, %cst_49 [2] : vector<4x8x8xf32> to vector<4x8xf32>
    %175 = vector.shape_cast %174 : vector<4x8xf32> to vector<4x8x1xf32>
    %176 = tpu.reciprocal %175 {approx = true} : vector<4x8x1xf32> -> vector<4x8x1xf32>
    %177 = vector.broadcast %176 : vector<4x8x1xf32> to vector<4x8x8xf32>
    %178 = arith.mulf %173, %177 : vector<4x8x8xf32>
    %cst_50 = arith.constant dense<0.000000e+00> : vector<4x8x8xf32>
    %179 = tpu.matmul %178, %160, %cst_50 {dimension_numbers = #tpu.dot_dimension_numbers<[2], [1], [1], [2], [0, 0, 0, 1, 1, 2], [0], [0]>} : vector<4x8x8xf32>, vector<4x8x8xf32>, vector<4x8x8xf32> -> vector<4x8x8xf32>
    %cst_51 = arith.constant dense<0.000000e+00> : vector<4x8x32xf32>
    %180 = tpu.matmul %179, %162, %cst_51 {dimension_numbers = #tpu.dot_dimension_numbers<[2], [1], [1], [2], [0, 0, 0, 1, 1, 2], [0], [0]>} : vector<4x8x8xf32>, vector<4x8x32xf32>, vector<4x8x32xf32> -> vector<4x8x32xf32>
    %181 = vector.extract_strided_slice %180 {offsets = [0, 0, 0], sizes = [1, 8, 32], strides = [1, 1, 1]} : vector<4x8x32xf32> to vector<1x8x32xf32>
    %182 = vector.shape_cast %181 : vector<1x8x32xf32> to vector<8x32xf32>
    %183 = vector.extract_strided_slice %180 {offsets = [1, 0, 0], sizes = [1, 8, 32], strides = [1, 1, 1]} : vector<4x8x32xf32> to vector<1x8x32xf32>
    %184 = vector.shape_cast %183 : vector<1x8x32xf32> to vector<8x32xf32>
    %185 = arith.addf %182, %184 : vector<8x32xf32>
    %186 = vector.extract_strided_slice %180 {offsets = [2, 0, 0], sizes = [1, 8, 32], strides = [1, 1, 1]} : vector<4x8x32xf32> to vector<1x8x32xf32>
    %187 = vector.shape_cast %186 : vector<1x8x32xf32> to vector<8x32xf32>
    %188 = arith.addf %185, %187 : vector<8x32xf32>
    %189 = vector.extract_strided_slice %180 {offsets = [3, 0, 0], sizes = [1, 8, 32], strides = [1, 1, 1]} : vector<4x8x32xf32> to vector<1x8x32xf32>
    %190 = vector.shape_cast %189 : vector<1x8x32xf32> to vector<8x32xf32>
    %191 = arith.addf %188, %190 : vector<8x32xf32>
    %192 = vector.broadcast %14 : vector<1x32xf32> to vector<8x32xf32>
    %193 = arith.addf %191, %192 : vector<8x32xf32>
    %194 = arith.addf %103, %193 : vector<8x32xf32>
    %cst_52 = arith.constant dense<0.000000e+00> : vector<8xf32>
    %195 = vector.multi_reduction <add>, %194, %cst_52 [1] : vector<8x32xf32> to vector<8xf32>
    %196 = vector.shape_cast %195 : vector<8xf32> to vector<8x1xf32>
    %cst_53 = arith.constant 3.200000e+01 : f32
    %197 = vector.broadcast %cst_53 : f32 to vector<8x1xf32>
    %198 = arith.divf %196, %197 : vector<8x1xf32>
    %199 = vector.broadcast %198 : vector<8x1xf32> to vector<8x32xf32>
    %200 = arith.subf %194, %199 : vector<8x32xf32>
    %201 = arith.mulf %200, %200 : vector<8x32xf32>
    %cst_54 = arith.constant dense<0.000000e+00> : vector<8xf32>
    %202 = vector.multi_reduction <add>, %201, %cst_54 [1] : vector<8x32xf32> to vector<8xf32>
    %203 = vector.shape_cast %202 : vector<8xf32> to vector<8x1xf32>
    %cst_55 = arith.constant 0.0322580636 : f32
    %204 = vector.broadcast %cst_55 : f32 to vector<8x1xf32>
    %205 = arith.mulf %203, %204 : vector<8x1xf32>
    %206 = math.sqrt %205 : vector<8x1xf32>
    %cst_56 = arith.constant 9.99999997E-7 : f32
    %207 = vector.broadcast %cst_56 : f32 to vector<8x1xf32>
    %208 = arith.addf %206, %207 : vector<8x1xf32>
    %209 = tpu.reciprocal %208 : vector<8x1xf32> -> vector<8x1xf32>
    %210 = vector.broadcast %209 : vector<8x1xf32> to vector<8x32xf32>
    %211 = arith.mulf %200, %210 : vector<8x32xf32>
    %212 = vector.broadcast %11 : vector<1x32xf32> to vector<8x32xf32>
    %213 = arith.mulf %212, %211 : vector<8x32xf32>
    %214 = vector.broadcast %12 : vector<1x32xf32> to vector<8x32xf32>
    %215 = arith.addf %213, %214 : vector<8x32xf32>
    %c0_57 = arith.constant 0 : index
    %c0_58 = arith.constant 0 : index
    %216 = vector.load %arg12[%c0_57, %c0_58] : memref<32x64xf32, #tpu.memory_space<vmem>>, vector<32x64xf32>
    %cst_59 = arith.constant dense<0.000000e+00> : vector<8x64xf32>
    %217 = tpu.matmul %215, %216, %cst_59 {dimension_numbers = #tpu.dot_dimension_numbers<[1], [0], [0], [1], [0, 0, 1, 1], [], []>} : vector<8x32xf32>, vector<32x64xf32>, vector<8x64xf32> -> vector<8x64xf32>
    %c0_60 = arith.constant 0 : index
    %c0_61 = arith.constant 0 : index
    %218 = vector.load %arg13[%c0_60, %c0_61] : memref<1x64xf32, #tpu.memory_space<vmem>>, vector<1x64xf32>
    %219 = vector.broadcast %218 : vector<1x64xf32> to vector<8x64xf32>
    %220 = arith.addf %217, %219 : vector<8x64xf32>
    %cst_62 = arith.constant 0.000000e+00 : f32
    %221 = vector.broadcast %cst_62 : f32 to vector<8x64xf32>
    %222 = arith.maximumf %220, %221 : vector<8x64xf32>
    %c0_63 = arith.constant 0 : index
    %c0_64 = arith.constant 0 : index
    %223 = vector.load %arg14[%c0_63, %c0_64] : memref<64x32xf32, #tpu.memory_space<vmem>>, vector<64x32xf32>
    %cst_65 = arith.constant dense<0.000000e+00> : vector<8x32xf32>
    %224 = tpu.matmul %222, %223, %cst_65 {dimension_numbers = #tpu.dot_dimension_numbers<[1], [0], [0], [1], [0, 0, 1, 1], [], []>} : vector<8x64xf32>, vector<64x32xf32>, vector<8x32xf32> -> vector<8x32xf32>
    %225 = arith.addf %194, %224 : vector<8x32xf32>
    %226 = vector.broadcast %15 : vector<1x32xf32> to vector<8x32xf32>
    %227 = arith.addf %225, %226 : vector<8x32xf32>
    %228 = vector.shape_cast %227 : vector<8x32xf32> to vector<1x8x32xf32>
    %c0_66 = arith.constant 0 : index
    %c0_67 = arith.constant 0 : index
    %c0_68 = arith.constant 0 : index
    %229 = vector.load %arg15[%c0_66, %c0_67, %c0_68] : memref<1x8x32xf32, #tpu.memory_space<vmem>>, vector<1x8x32xf32>
    tpu.vector_store %arg15[%c0_66, %c0_67, %c0_68], %228 {strides = array<i32>} : memref<1x8x32xf32, #tpu.memory_space<vmem>>, vector<1x8x32xf32>,
    return
  }
  func.func @transform_0(%arg0: i32) -> (i32, i32, i32) {
    %c0_i32 = arith.constant 0 : i32
    %c0_i32_0 = arith.constant 0 : i32
    %c0_i32_1 = arith.constant 0 : i32
    return %arg0, %c0_i32, %c0_i32_0 : i32, i32, i32
  }
  func.func @transform_1(%arg0: i32) -> (i32, i32, i32) {
    %c0_i32 = arith.constant 0 : i32
    %c0_i32_0 = arith.constant 0 : i32
    %c0_i32_1 = arith.constant 0 : i32
    return %arg0, %c0_i32, %c0_i32_0 : i32, i32, i32
  }
  func.func @transform_2(%arg0: i32) -> (i32, i32, i32) {
    %c0_i32 = arith.constant 0 : i32
    %c0_i32_0 = arith.constant 0 : i32
    %c0_i32_1 = arith.constant 0 : i32
    return %arg0, %c0_i32, %c0_i32_0 : i32, i32, i32
  }
  func.func @transform_3(%arg0: i32) -> (i32, i32, i32) {
    %c0_i32 = arith.constant 0 : i32
    %c0_i32_0 = arith.constant 0 : i32
    %c0_i32_1 = arith.constant 0 : i32
    return %arg0, %c0_i32, %c0_i32_0 : i32, i32, i32
  }
  func.func @transform_4(%arg0: i32) -> (i32, i32) {
    %c0_i32 = arith.constant 0 : i32
    %c0_i32_0 = arith.constant 0 : i32
    %c0_i32_1 = arith.constant 0 : i32
    return %c0_i32, %c0_i32_0 : i32, i32
  }
  func.func @transform_5(%arg0: i32) -> (i32, i32) {
    %c0_i32 = arith.constant 0 : i32
    %c0_i32_0 = arith.constant 0 : i32
    %c0_i32_1 = arith.constant 0 : i32
    return %c0_i32, %c0_i32_0 : i32, i32
  }
  func.func @transform_6(%arg0: i32) -> (i32, i32) {
    %c0_i32 = arith.constant 0 : i32
    %c0_i32_0 = arith.constant 0 : i32
    %c0_i32_1 = arith.constant 0 : i32
    return %c0_i32, %c0_i32_0 : i32, i32
  }
  func.func @transform_7(%arg0: i32) -> (i32, i32) {
    %c0_i32 = arith.constant 0 : i32
    %c0_i32_0 = arith.constant 0 : i32
    %c0_i32_1 = arith.constant 0 : i32
    return %c0_i32, %c0_i32_0 : i32, i32
  }
  func.func @transform_8(%arg0: i32) -> (i32, i32) {
    %c0_i32 = arith.constant 0 : i32
    %c0_i32_0 = arith.constant 0 : i32
    %c0_i32_1 = arith.constant 0 : i32
    return %c0_i32, %c0_i32_0 : i32, i32
  }
  func.func @transform_9(%arg0: i32) -> (i32, i32) {
    %c0_i32 = arith.constant 0 : i32
    %c0_i32_0 = arith.constant 0 : i32
    %c0_i32_1 = arith.constant 0 : i32
    return %c0_i32, %c0_i32_0 : i32, i32
  }
  func.func @transform_10(%arg0: i32) -> (i32, i32, i32, i32) {
    %c0_i32 = arith.constant 0 : i32
    %c0_i32_0 = arith.constant 0 : i32
    %c0_i32_1 = arith.constant 0 : i32
    %c0_i32_2 = arith.constant 0 : i32
    %c0_i32_3 = arith.constant 0 : i32
    return %c0_i32, %c0_i32_0, %c0_i32_1, %c0_i32_2 : i32, i32, i32, i32
  }
  func.func @transform_11(%arg0: i32) -> (i32, i32) {
    %c0_i32 = arith.constant 0 : i32
    %c0_i32_0 = arith.constant 0 : i32
    %c0_i32_1 = arith.constant 0 : i32
    return %c0_i32, %c0_i32_0 : i32, i32
  }
  func.func @transform_12(%arg0: i32) -> (i32, i32) {
    %c0_i32 = arith.constant 0 : i32
    %c0_i32_0 = arith.constant 0 : i32
    %c0_i32_1 = arith.constant 0 : i32
    return %c0_i32, %c0_i32_0 : i32, i32
  }
  func.func @transform_13(%arg0: i32) -> (i32, i32) {
    %c0_i32 = arith.constant 0 : i32
    %c0_i32_0 = arith.constant 0 : i32
    %c0_i32_1 = arith.constant 0 : i32
    return %c0_i32, %c0_i32_0 : i32, i32
  }
  func.func @transform_14(%arg0: i32) -> (i32, i32, i32) {
    %c0_i32 = arith.constant 0 : i32
    %c0_i32_0 = arith.constant 0 : i32
    %c0_i32_1 = arith.constant 0 : i32
    return %arg0, %c0_i32, %c0_i32_0 : i32, i32, i32
  }
}

</mosaic_0001>

<llo_original>
// kernel: tpu_custom_call.1
$region0: #{tpu_custom_call.1}
  #allocation0 [shape = 'u32[]', space=smem, size = 0x4, offset = 0x4, fixed_abs, tag = 'smem constant byte address 0x4 - core index']
  #allocation1 [shape = 'u32[72,128]{1,0:T(1,128)}', space=vmem, size = 0x9000, scoped, tag = 'internal scratch']
  %s0 = inlined_call_operand.vmem [shape: f32[4,8,32], index: 0, kind: input, shape index: {}]
  %s1 = inlined_call_operand.hbm [shape: f32[4,8,32], index: 1, kind: input, shape index: {}]
  %s2 = inlined_call_operand.hbm [shape: f32[4,8,8], index: 2, kind: input, shape index: {}]
  %s3 = inlined_call_operand.vmem [shape: f32[4,1,8], index: 3, kind: input, shape index: {}]
  %s4 = inlined_call_operand.hbm [shape: f32[10,32], index: 4, kind: input, shape index: {}]
  %s5 = inlined_call_operand.hbm [shape: f32[32,96], index: 5, kind: input, shape index: {}]
  %s6 = inlined_call_operand.vmem [shape: f32[1,96], index: 6, kind: input, shape index: {}]
  %s7 = inlined_call_operand.hbm [shape: f32[32,32], index: 7, kind: input, shape index: {}]
  %s8 = inlined_call_operand.hbm [shape: f32[32,64], index: 8, kind: input, shape index: {}]
  %s9 = inlined_call_operand.vmem [shape: f32[1,64], index: 9, kind: input, shape index: {}]
  %s10 = inlined_call_operand.vmem [shape: f32[2,4,8,32], index: 10, kind: input, shape index: {}]
  %s11 = inlined_call_operand.hbm [shape: f32[32,64], index: 11, kind: input, shape index: {}]
  %s12 = inlined_call_operand.vmem [shape: f32[1,64], index: 12, kind: input, shape index: {}]
  %s13 = inlined_call_operand.vmem [shape: f32[64,32], index: 13, kind: input, shape index: {}]
  %s14 = inlined_call_operand.hbm [shape: f32[4,8,32], index: 14, kind: output, shape index: {}]
  %s15 = sld [smem:[#allocation0]]
  $region117: #{tpu_custom_call.1} parent=0
    _
  %s17 = ssub.s32 1, %s15
  %s18 = scalar_select 0, %s17, %s15
  $region1: #{tpu_custom_call.1} parent=0
    #allocation2 [shape = 'u8[8192]{0}', space=vmem, size = 0x2000, scoped, tag = 'input window, operand 1']
    #allocation3 [shape = 's32[2]{0}', space=sflag, size = 0x8, scoped, tag = 'scoped memory for tpu_custom_call.1']
    #allocation4 [shape = 's32[2]{0}', space=sflag, size = 0x8, scoped, tag = 'scoped memory for tpu_custom_call.1']
    #allocation5 [shape = 'u8[8192]{0}', space=vmem, size = 0x2000, scoped, tag = 'input window, operand 2']
    #allocation6 [shape = 's32[2]{0}', space=sflag, size = 0x8, scoped, tag = 'scoped memory for tpu_custom_call.1']
    #allocation7 [shape = 'u8[8192]{0}', space=vmem, size = 0x2000, scoped, tag = 'input window, operand 4, single buffered']
    #allocation8 [shape = 'u8[16384]{0}', space=vmem, size = 0x4000, scoped, tag = 'input window, operand 5, single buffered']
    #allocation9 [shape = 's32[1]{0}', space=sflag, size = 0x4, scoped, tag = 'scoped memory for tpu_custom_call.1']
    #allocation10 [shape = 'u8[16384]{0}', space=vmem, size = 0x4000, scoped, tag = 'input window, operand 7, single buffered']
    #allocation11 [shape = 'u8[16384]{0}', space=vmem, size = 0x4000, scoped, tag = 'input window, operand 8, single buffered']
    #allocation12 [shape = 's32[1]{0}', space=sflag, size = 0x4, scoped, tag = 'scoped memory for tpu_custom_call.1']
    #allocation13 [shape = 'u8[16384]{0}', space=vmem, size = 0x4000, scoped, tag = 'input window, operand 11, single buffered']
    #allocation14 [shape = 'u8[8192]{0}', space=vmem, size = 0x2000, scoped, tag = 'output window, operand 0']
    %19 = vsyncpa [#allocation3], 0
    %s20 = scalar_lea.sflag [#allocation3], 1
    %21 = vsyncpa %s20, 0
    %22 = vsyncpa [#allocation6], 0
    %s23 = scalar_lea.sflag [#allocation6], 1
    %24 = vsyncpa %s23, 0
    %25 = vsyncpa [#allocation9], 0
    %26 = vsyncpa [#allocation12], 0
    %27 = vsyncpa [#allocation4], 0
    %s28 = scalar_lea.sflag [#allocation4], 1
    %29 = vsyncpa %s28, 0
    loop: start=0, step=1, limit=6
    $region2: #{tpu_custom_call.1} parent=1 // loop_pre_header
      _
    $region3: #{tpu_custom_call.1} parent=1 // loop_header
      %s31 = sphi 0, %s35
      %p32 = scmp.ge.s32.totalorder %s31, 6
      %s41 = sphi 0, %s43
      %s44 = sphi 0, %s41
      %s45 = sphi 0, %s44
      %s61 = sphi 0, %s45
      %s67 = sphi 0, %s69
      %s70 = sphi 0, %s67
      %s71 = sphi 0, %s70
      %s87 = sphi 0, %s71
      %s93 = sphi 0, %s95
      %s96 = sphi 0, %s93
      %s97 = sphi 0, %s96
      %s113 = sphi 0, %s97
      %s119 = sphi 0, %s121
      %s122 = sphi 0, %s119
      %s123 = sphi 0, %s122
      %s139 = sphi 0, %s123
      %s143 = sphi 0, %s143
      %s145 = sphi 0, %s143
      %s146 = sphi 0, %s145
      %s160 = sphi 0, %s146
      %s164 = sphi 0, %s164
      %s166 = sphi 0, %s164
      %s167 = sphi 0, %s166
      %s181 = sphi 0, %s167
      %s185 = sphi 0, %s185
      %s187 = sphi 0, %s185
      %s188 = sphi 0, %s187
      %s202 = sphi 0, %s188
      %s206 = sphi 0, %s206
      %s208 = sphi 0, %s206
      %s209 = sphi 0, %s208
      %s223 = sphi 0, %s209
      %s227 = sphi 0, %s227
      %s229 = sphi 0, %s227
      %s230 = sphi 0, %s229
      %s244 = sphi 0, %s230
      %s248 = sphi 0, %s248
      %s250 = sphi 0, %s248
      %s251 = sphi 0, %s250
      %s265 = sphi 0, %s251
      %s269 = sphi 0, %s269
      %s271 = sphi 0, %s269
      %s272 = sphi 0, %s271
      %s286 = sphi 0, %s272
      %s290 = sphi 0, %s290
      %s292 = sphi 0, %s290
      %s293 = sphi 0, %s292
      %s307 = sphi 0, %s293
      %s311 = sphi 0, %s311
      %s313 = sphi 0, %s311
      %s314 = sphi 0, %s313
      %s328 = sphi 0, %s314
      %s332 = sphi 0, %s332
      %s334 = sphi 0, %s332
      %s335 = sphi 0, %s334
      %s349 = sphi 0, %s335
      %s355 = sphi 0, %s357
      %s358 = sphi 0, %s355
      %s359 = sphi 0, %s358
      %s375 = sphi 0, %s359
    $region4: #{tpu_custom_call.1} parent=1 // loop_header_branch
      %34 = sbr.rel (%p32) target = $region8
    $region5: #{tpu_custom_call.1} parent=1 // loop_body
      %s36 = ssub.s32 %s31, 1
      %s37 = ssub.s32 %s31, 2
      %s38 = sadd.s32 %s31, 1
      %s39 = ssub.s32 %s31, %s38
      %p40 = scmp.eq.s32.totalorder %s39, 0
      %s42 = sadd.s32 %s41, 1
      %s43 = scalar_select %p40, %s41, %s42
      %p46 = pneg %p40
      %p47 = scmp.eq.s32.totalorder %s31, 3
      %p48 = por %p46, %p47
      %p49 = scmp.ne.s32.totalorder %s41, %s44
      %p50 = scmp.eq.s32.totalorder %s31, 0
      %p51 = por %p49, %p50
      %p52 = scmp.ne.s32.totalorder %s41, %s44
      %p53 = scmp.eq.s32.totalorder %s36, 3
      %p54 = por %p52, %p53
      %p55 = scmp.ne.s32.totalorder %s44, %s45
      %p56 = scmp.eq.s32.totalorder %s36, 0
      %p57 = por %p55, %p56
      %p58 = scmp.ne.s32.totalorder %s44, %s45
      %p59 = scmp.eq.s32.totalorder %s37, 3
      %p60 = por %p58, %p59
      %p62 = scmp.ne.s32.totalorder %s45, %s61
      %p63 = scmp.eq.s32.totalorder %s37, 0
      %p64 = por %p62, %p63
      %s65 = ssub.s32 %s31, %s38
      %p66 = scmp.eq.s32.totalorder %s65, 0
      %s68 = sadd.s32 %s67, 1
      %s69 = scalar_select %p66, %s67, %s68
      %p72 = pneg %p66
      %p73 = scmp.eq.s32.totalorder %s31, 3
      %p74 = por %p72, %p73
      %p75 = scmp.ne.s32.totalorder %s67, %s70
      %p76 = scmp.eq.s32.totalorder %s31, 0
      %p77 = por %p75, %p76
      %p78 = scmp.ne.s32.totalorder %s67, %s70
      %p79 = scmp.eq.s32.totalorder %s36, 3
      %p80 = por %p78, %p79
      %p81 = scmp.ne.s32.totalorder %s70, %s71
      %p82 = scmp.eq.s32.totalorder %s36, 0
      %p83 = por %p81, %p82
      %p84 = scmp.ne.s32.totalorder %s70, %s71
      %p85 = scmp.eq.s32.totalorder %s37, 3
      %p86 = por %p84, %p85
      %p88 = scmp.ne.s32.totalorder %s71, %s87
      %p89 = scmp.eq.s32.totalorder %s37, 0
      %p90 = por %p88, %p89
      %s91 = ssub.s32 %s31, %s38
      %p92 = scmp.eq.s32.totalorder %s91, 0
      %s94 = sadd.s32 %s93, 1
      %s95 = scalar_select %p92, %s93, %s94
      %p98 = pneg %p92
      %p99 = scmp.eq.s32.totalorder %s31, 3
      %p100 = por %p98, %p99
      %p101 = scmp.ne.s32.totalorder %s93, %s96
      %p102 = scmp.eq.s32.totalorder %s31, 0
      %p103 = por %p101, %p102
      %p104 = scmp.ne.s32.totalorder %s93, %s96
      %p105 = scmp.eq.s32.totalorder %s36, 3
      %p106 = por %p104, %p105
      %p107 = scmp.ne.s32.totalorder %s96, %s97
      %p108 = scmp.eq.s32.totalorder %s36, 0
      %p109 = por %p107, %p108
      %p110 = scmp.ne.s32.totalorder %s96, %s97
      %p111 = scmp.eq.s32.totalorder %s37, 3
      %p112 = por %p110, %p111
      %p114 = scmp.ne.s32.totalorder %s97, %s113
      %p115 = scmp.eq.s32.totalorder %s37, 0
      %p116 = por %p114, %p115
      %s117 = ssub.s32 %s31, %s38
      %p118 = scmp.eq.s32.totalorder %s117, 0
      %s120 = sadd.s32 %s119, 1
      %s121 = scalar_select %p118, %s119, %s120
      %p124 = pneg %p118
      %p125 = scmp.eq.s32.totalorder %s31, 3
      %p126 = por %p124, %p125
      %p127 = scmp.ne.s32.totalorder %s119, %s122
      %p128 = scmp.eq.s32.totalorder %s31, 0
      %p129 = por %p127, %p128
      %p130 = scmp.ne.s32.totalorder %s119, %s122
      %p131 = scmp.eq.s32.totalorder %s36, 3
      %p132 = por %p130, %p131
      %p133 = scmp.ne.s32.totalorder %s122, %s123
      %p134 = scmp.eq.s32.totalorder %s36, 0
      %p135 = por %p133, %p134
      %p136 = scmp.ne.s32.totalorder %s122, %s123
      %p137 = scmp.eq.s32.totalorder %s37, 3
      %p138 = por %p136, %p137
      %p140 = scmp.ne.s32.totalorder %s123, %s139
      %p141 = scmp.eq.s32.totalorder %s37, 0
      %p142 = por %p140, %p141
      %s144 = sadd.s32 %s143, 1
      %p147 = scmp.eq.s32.totalorder %s31, 3
      %p148 = scmp.ne.s32.totalorder %s143, %s145
      %p149 = scmp.eq.s32.totalorder %s31, 0
      %p150 = por %p148, %p149
      %p151 = scmp.ne.s32.totalorder %s143, %s145
      %p152 = scmp.eq.s32.totalorder %s36, 3
      %p153 = por %p151, %p152
      %p154 = scmp.ne.s32.totalorder %s145, %s146
      %p155 = scmp.eq.s32.totalorder %s36, 0
      %p156 = por %p154, %p155
      %p157 = scmp.ne.s32.totalorder %s145, %s146
      %p158 = scmp.eq.s32.totalorder %s37, 3
      %p159 = por %p157, %p158
      %p161 = scmp.ne.s32.totalorder %s146, %s160
      %p162 = scmp.eq.s32.totalorder %s37, 0
      %p163 = por %p161, %p162
      %s165 = sadd.s32 %s164, 1
      %p168 = scmp.eq.s32.totalorder %s31, 3
      %p169 = scmp.ne.s32.totalorder %s164, %s166
      %p170 = scmp.eq.s32.totalorder %s31, 0
      %p171 = por %p169, %p170
      %p172 = scmp.ne.s32.totalorder %s164, %s166
      %p173 = scmp.eq.s32.totalorder %s36, 3
      %p174 = por %p172, %p173
      %p175 = scmp.ne.s32.totalorder %s166, %s167
      %p176 = scmp.eq.s32.totalorder %s36, 0
      %p177 = por %p175, %p176
      %p178 = scmp.ne.s32.totalorder %s166, %s167
      %p179 = scmp.eq.s32.totalorder %s37, 3
      %p180 = por %p178, %p179
      %p182 = scmp.ne.s32.totalorder %s167, %s181
      %p183 = scmp.eq.s32.totalorder %s37, 0
      %p184 = por %p182, %p183
      %s186 = sadd.s32 %s185, 1
      %p189 = scmp.eq.s32.totalorder %s31, 3
      %p190 = scmp.ne.s32.totalorder %s185, %s187
      %p191 = scmp.eq.s32.totalorder %s31, 0
      %p192 = por %p190, %p191
      %p193 = scmp.ne.s32.totalorder %s185, %s187
      %p194 = scmp.eq.s32.totalorder %s36, 3
      %p195 = por %p193, %p194
      %p196 = scmp.ne.s32.totalorder %s187, %s188
      %p197 = scmp.eq.s32.totalorder %s36, 0
      %p198 = por %p196, %p197
      %p199 = scmp.ne.s32.totalorder %s187, %s188
      %p200 = scmp.eq.s32.totalorder %s37, 3
      %p201 = por %p199, %p200
      %p203 = scmp.ne.s32.totalorder %s188, %s202
      %p204 = scmp.eq.s32.totalorder %s37, 0
      %p205 = por %p203, %p204
      %s207 = sadd.s32 %s206, 1
      %p210 = scmp.eq.s32.totalorder %s31, 3
      %p211 = scmp.ne.s32.totalorder %s206, %s208
      %p212 = scmp.eq.s32.totalorder %s31, 0
      %p213 = por %p211, %p212
      %p214 = scmp.ne.s32.totalorder %s206, %s208
      %p215 = scmp.eq.s32.totalorder %s36, 3
      %p216 = por %p214, %p215
      %p217 = scmp.ne.s32.totalorder %s208, %s209
      %p218 = scmp.eq.s32.totalorder %s36, 0
      %p219 = por %p217, %p218
      %p220 = scmp.ne.s32.totalorder %s208, %s209
      %p221 = scmp.eq.s32.totalorder %s37, 3
      %p222 = por %p220, %p221
      %p224 = scmp.ne.s32.totalorder %s209, %s223
      %p225 = scmp.eq.s32.totalorder %s37, 0
      %p226 = por %p224, %p225
      %s228 = sadd.s32 %s227, 1
      %p231 = scmp.eq.s32.totalorder %s31, 3
      %p232 = scmp.ne.s32.totalorder %s227, %s229
      %p233 = scmp.eq.s32.totalorder %s31, 0
      %p234 = por %p232, %p233
      %p235 = scmp.ne.s32.totalorder %s227, %s229
      %p236 = scmp.eq.s32.totalorder %s36, 3
      %p237 = por %p235, %p236
      %p238 = scmp.ne.s32.totalorder %s229, %s230
      %p239 = scmp.eq.s32.totalorder %s36, 0
      %p240 = por %p238, %p239
      %p241 = scmp.ne.s32.totalorder %s229, %s230
      %p242 = scmp.eq.s32.totalorder %s37, 3
      %p243 = por %p241, %p242
      %p245 = scmp.ne.s32.totalorder %s230, %s244
      %p246 = scmp.eq.s32.totalorder %s37, 0
      %p247 = por %p245, %p246
      %s249 = sadd.s32 %s248, 1
      %p252 = scmp.eq.s32.totalorder %s31, 3
      %p253 = scmp.ne.s32.totalorder %s248, %s250
      %p254 = scmp.eq.s32.totalorder %s31, 0
      %p255 = por %p253, %p254
      %p256 = scmp.ne.s32.totalorder %s248, %s250
      %p257 = scmp.eq.s32.totalorder %s36, 3
      %p258 = por %p256, %p257
      %p259 = scmp.ne.s32.totalorder %s250, %s251
      %p260 = scmp.eq.s32.totalorder %s36, 0
      %p261 = por %p259, %p260
      %p262 = scmp.ne.s32.totalorder %s250, %s251
      %p263 = scmp.eq.s32.totalorder %s37, 3
      %p264 = por %p262, %p263
      %p266 = scmp.ne.s32.totalorder %s251, %s265
      %p267 = scmp.eq.s32.totalorder %s37, 0
      %p268 = por %p266, %p267
      %s270 = sadd.s32 %s269, 1
      %p273 = scmp.eq.s32.totalorder %s31, 3
      %p274 = scmp.ne.s32.totalorder %s269, %s271
      %p275 = scmp.eq.s32.totalorder %s31, 0
      %p276 = por %p274, %p275
      %p277 = scmp.ne.s32.totalorder %s269, %s271
      %p278 = scmp.eq.s32.totalorder %s36, 3
      %p279 = por %p277, %p278
      %p280 = scmp.ne.s32.totalorder %s271, %s272
      %p281 = scmp.eq.s32.totalorder %s36, 0
      %p282 = por %p280, %p281
      %p283 = scmp.ne.s32.totalorder %s271, %s272
      %p284 = scmp.eq.s32.totalorder %s37, 3
      %p285 = por %p283, %p284
      %p287 = scmp.ne.s32.totalorder %s272, %s286
      %p288 = scmp.eq.s32.totalorder %s37, 0
      %p289 = por %p287, %p288
      %s291 = sadd.s32 %s290, 1
      %p294 = scmp.eq.s32.totalorder %s31, 3
      %p295 = scmp.ne.s32.totalorder %s290, %s292
      %p296 = scmp.eq.s32.totalorder %s31, 0
      %p297 = por %p295, %p296
      %p298 = scmp.ne.s32.totalorder %s290, %s292
      %p299 = scmp.eq.s32.totalorder %s36, 3
      %p300 = por %p298, %p299
      %p301 = scmp.ne.s32.totalorder %s292, %s293
      %p302 = scmp.eq.s32.totalorder %s36, 0
      %p303 = por %p301, %p302
      %p304 = scmp.ne.s32.totalorder %s292, %s293
      %p305 = scmp.eq.s32.totalorder %s37, 3
      %p306 = por %p304, %p305
      %p308 = scmp.ne.s32.totalorder %s293, %s307
      %p309 = scmp.eq.s32.totalorder %s37, 0
      %p310 = por %p308, %p309
      %s312 = sadd.s32 %s311, 1
      %p315 = scmp.eq.s32.totalorder %s31, 3
      %p316 = scmp.ne.s32.totalorder %s311, %s313
      %p317 = scmp.eq.s32.totalorder %s31, 0
      %p318 = por %p316, %p317
      %p319 = scmp.ne.s32.totalorder %s311, %s313
      %p320 = scmp.eq.s32.totalorder %s36, 3
      %p321 = por %p319, %p320
      %p322 = scmp.ne.s32.totalorder %s313, %s314
      %p323 = scmp.eq.s32.totalorder %s36, 0
      %p324 = por %p322, %p323
      %p325 = scmp.ne.s32.totalorder %s313, %s314
      %p326 = scmp.eq.s32.totalorder %s37, 3
      %p327 = por %p325, %p326
      %p329 = scmp.ne.s32.totalorder %s314, %s328
      %p330 = scmp.eq.s32.totalorder %s37, 0
      %p331 = por %p329, %p330
      %s333 = sadd.s32 %s332, 1
      %p336 = scmp.eq.s32.totalorder %s31, 3
      %p337 = scmp.ne.s32.totalorder %s332, %s334
      %p338 = scmp.eq.s32.totalorder %s31, 0
      %p339 = por %p337, %p338
      %p340 = scmp.ne.s32.totalorder %s332, %s334
      %p341 = scmp.eq.s32.totalorder %s36, 3
      %p342 = por %p340, %p341
      %p343 = scmp.ne.s32.totalorder %s334, %s335
      %p344 = scmp.eq.s32.totalorder %s36, 0
      %p345 = por %p343, %p344
      %p346 = scmp.ne.s32.totalorder %s334, %s335
      %p347 = scmp.eq.s32.totalorder %s37, 3
      %p348 = por %p346, %p347
      %p350 = scmp.ne.s32.totalorder %s335, %s349
      %p351 = scmp.eq.s32.totalorder %s37, 0
      %p352 = por %p350, %p351
      %s353 = ssub.s32 %s31, %s38
      %p354 = scmp.eq.s32.totalorder %s353, 0
      %s356 = sadd.s32 %s355, 1
      %s357 = scalar_select %p354, %s355, %s356
      %p360 = pneg %p354
      %p361 = scmp.eq.s32.totalorder %s31, 3
      %p362 = por %p360, %p361
      %p363 = scmp.ne.s32.totalorder %s355, %s358
      %p364 = scmp.eq.s32.totalorder %s31, 0
      %p365 = por %p363, %p364
      %p366 = scmp.ne.s32.totalorder %s355, %s358
      %p367 = scmp.eq.s32.totalorder %s36, 3
      %p368 = por %p366, %p367
      %p369 = scmp.ne.s32.totalorder %s358, %s359
      %p370 = scmp.eq.s32.totalorder %s36, 0
      %p371 = por %p369, %p370
      %p372 = scmp.ne.s32.totalorder %s358, %s359
      %p373 = scmp.eq.s32.totalorder %s37, 3
      %p374 = por %p372, %p373
      %p376 = scmp.ne.s32.totalorder %s359, %s375
      %p377 = scmp.eq.s32.totalorder %s37, 0
      %p378 = por %p376, %p377
      %p379 = scmp.le.s32.totalorder 1, %s31
      %p380 = scmp.lt.s32.totalorder %s31, 5
      %p381 = pnand %p379, %p380
      %p382 = pneg %p381
      // Predicated region
      $region9: #{tpu_custom_call.1} parent=5 // pred_check
        _
      $region10: #{tpu_custom_call.1} parent=5 // pred_check_branch
        %384 = sbr.rel (%p381) target = $region12
      $region11: #{tpu_custom_call.1} parent=5 // pred_region
        %s385 = ssub.s32 %s31, 1
        // Predicated region
        $region13: #{tpu_custom_call.1} parent=11 // pred_check
          %p386 = pneg %p156
        $region14: #{tpu_custom_call.1} parent=11 // pred_check_branch
          %388 = sbr.rel (%p386) target = $region16
        $region15: #{tpu_custom_call.1} parent=11 // pred_region
          %390 = vsyncadd [#allocation6], 0
          %s391 = sshll.u32 %s4, 4
          %s392 = int_to_ptr.hbm [resolvable:$true] %s391
          %s393 = sshll.u32 [#allocation7], 4
          %s394 = int_to_ptr.vmem [resolvable:$true] %s393
          %399 = dma.hbm_to_vmem [thread:$0]  %s392, 256, %s394, [#allocation6], 128, 128, 8
        $region16: #{tpu_custom_call.1} parent=11 // pred_fallthru
          _
        // Predicated region
        $region17: #{tpu_custom_call.1} parent=11 // pred_check
          %p400 = pneg %p177
        $region18: #{tpu_custom_call.1} parent=11 // pred_check_branch
          %402 = sbr.rel (%p400) target = $region20
        $region19: #{tpu_custom_call.1} parent=11 // pred_region
          %404 = vsyncadd [#allocation9], 0
          %s405 = sshll.u32 %s5, 4
          %s406 = int_to_ptr.hbm [resolvable:$true] %s405
          %s407 = sshll.u32 [#allocation8], 4
          %s408 = int_to_ptr.vmem [resolvable:$true] %s407
          %413 = dma.hbm_to_vmem [thread:$0]  %s406, 512, %s408, [#allocation9], 128, 128, 8
        $region20: #{tpu_custom_call.1} parent=11 // pred_fallthru
          _
        // Predicated region
        $region21: #{tpu_custom_call.1} parent=11 // pred_check
          %p414 = pneg %p198
        $region22: #{tpu_custom_call.1} parent=11 // pred_check_branch
          %416 = sbr.rel (%p414) target = $region24
        $region23: #{tpu_custom_call.1} parent=11 // pred_region
          _
        $region24: #{tpu_custom_call.1} parent=11 // pred_fallthru
          _
        // Predicated region
        $region25: #{tpu_custom_call.1} parent=11 // pred_check
          %p417 = pneg %p219
        $region26: #{tpu_custom_call.1} parent=11 // pred_check_branch
          %419 = sbr.rel (%p417) target = $region28
        $region27: #{tpu_custom_call.1} parent=11 // pred_region
          %421 = vsyncadd [#allocation9], 0
          %s422 = sshll.u32 %s7, 4
          %s423 = int_to_ptr.hbm [resolvable:$true] %s422
          %s424 = sshll.u32 [#allocation10], 4
          %s425 = int_to_ptr.vmem [resolvable:$true] %s424
          %430 = dma.hbm_to_vmem [thread:$0]  %s423, 512, %s425, [#allocation9], 128, 128, 8
        $region28: #{tpu_custom_call.1} parent=11 // pred_fallthru
          _
        // Predicated region
        $region29: #{tpu_custom_call.1} parent=11 // pred_check
          %p431 = pneg %p240
        $region30: #{tpu_custom_call.1} parent=11 // pred_check_branch
          %433 = sbr.rel (%p431) target = $region32
        $region31: #{tpu_custom_call.1} parent=11 // pred_region
          %435 = vsyncadd [#allocation12], 0
          %s436 = sshll.u32 %s8, 4
          %s437 = int_to_ptr.hbm [resolvable:$true] %s436
          %s438 = sshll.u32 [#allocation11], 4
          %s439 = int_to_ptr.vmem [resolvable:$true] %s438
          %444 = dma.hbm_to_vmem [thread:$0]  %s437, 512, %s439, [#allocation12], 128, 128, 8
        $region32: #{tpu_custom_call.1} parent=11 // pred_fallthru
          _
        // Predicated region
        $region33: #{tpu_custom_call.1} parent=11 // pred_check
          %p445 = pneg %p261
        $region34: #{tpu_custom_call.1} parent=11 // pred_check_branch
          %447 = sbr.rel (%p445) target = $region36
        $region35: #{tpu_custom_call.1} parent=11 // pred_region
          _
        $region36: #{tpu_custom_call.1} parent=11 // pred_fallthru
          _
        // Predicated region
        $region37: #{tpu_custom_call.1} parent=11 // pred_check
          %p448 = pneg %p282
        $region38: #{tpu_custom_call.1} parent=11 // pred_check_branch
          %450 = sbr.rel (%p448) target = $region40
        $region39: #{tpu_custom_call.1} parent=11 // pred_region
          _
        $region40: #{tpu_custom_call.1} parent=11 // pred_fallthru
          _
        // Predicated region
        $region41: #{tpu_custom_call.1} parent=11 // pred_check
          %p451 = pneg %p303
        $region42: #{tpu_custom_call.1} parent=11 // pred_check_branch
          %453 = sbr.rel (%p451) target = $region44
        $region43: #{tpu_custom_call.1} parent=11 // pred_region
          %455 = vsyncadd [#allocation12], 0
          %s456 = sshll.u32 %s11, 4
          %s457 = int_to_ptr.hbm [resolvable:$true] %s456
          %s458 = sshll.u32 [#allocation13], 4
          %s459 = int_to_ptr.vmem [resolvable:$true] %s458
          %464 = dma.hbm_to_vmem [thread:$0]  %s457, 512, %s459, [#allocation12], 128, 128, 8
        $region44: #{tpu_custom_call.1} parent=11 // pred_fallthru
          _
        // Predicated region
        $region45: #{tpu_custom_call.1} parent=11 // pred_check
          %p465 = pneg %p324
        $region46: #{tpu_custom_call.1} parent=11 // pred_check_branch
          %467 = sbr.rel (%p465) target = $region48
        $region47: #{tpu_custom_call.1} parent=11 // pred_region
          _
        $region48: #{tpu_custom_call.1} parent=11 // pred_fallthru
          _
        // Predicated region
        $region49: #{tpu_custom_call.1} parent=11 // pred_check
          %p468 = pneg %p345
        $region50: #{tpu_custom_call.1} parent=11 // pred_check_branch
          %470 = sbr.rel (%p468) target = $region52
        $region51: #{tpu_custom_call.1} parent=11 // pred_region
          _
        $region52: #{tpu_custom_call.1} parent=11 // pred_fallthru
          _
      $region12: #{tpu_custom_call.1} parent=5 // pred_fallthru
        _
      %p471 = scmp.lt.s32.totalorder %s31, 4
      // Predicated region
      $region53: #{tpu_custom_call.1} parent=5 // pred_check
        %p472 = pneg %p471
      $region54: #{tpu_custom_call.1} parent=5 // pred_check_branch
        %474 = sbr.rel (%p472) target = $region56
      $region55: #{tpu_custom_call.1} parent=5 // pred_region
        // Predicated region
        $region57: #{tpu_custom_call.1} parent=55 // pred_check
          %p475 = pneg %p51
        $region58: #{tpu_custom_call.1} parent=55 // pred_check_branch
          %477 = sbr.rel (%p475) target = $region60
        $region59: #{tpu_custom_call.1} parent=55 // pred_region
          %p478 = scmp.lt.s32.totalorder %s31, 3
          %s479 = scalar_select %p478, %s31, 3
          %s480 = smul.addr %s479, 8
          %s481 = scalar_lea.vmem %s0, %s480
        $region60: #{tpu_custom_call.1} parent=55 // pred_fallthru
          _
        // Predicated region
        $region61: #{tpu_custom_call.1} parent=55 // pred_check
          %p482 = pneg %p77
        $region62: #{tpu_custom_call.1} parent=55 // pred_check_branch
          %484 = sbr.rel (%p482) target = $region64
        $region63: #{tpu_custom_call.1} parent=55 // pred_region
          %s485 = sand.u32 %s67, 1
          %s486 = scalar_lea.sflag [#allocation3], %s485
          %s487 = sand.u32 %s67, 1
          %s488 = smul.addr %s487, 8
          %s489 = scalar_lea.vmem [#allocation2], %s488
          %491 = vsyncadd %s486, 0
          %s492 = smul.addr %s31, 8
          %s493 = scalar_lea.hbm %s1, %s492
          %s495 = sshll.u32 %s493, 4
          %s496 = int_to_ptr.hbm [resolvable:$true] %s495
          %s497 = sshll.u32 %s489, 4
          %s498 = int_to_ptr.vmem [resolvable:$true] %s497
          %500 = dma.hbm_to_vmem [thread:$0]  %s496, 128, %s498, %s486
        $region64: #{tpu_custom_call.1} parent=55 // pred_fallthru
          _
        // Predicated region
        $region65: #{tpu_custom_call.1} parent=55 // pred_check
          %p501 = pneg %p103
        $region66: #{tpu_custom_call.1} parent=55 // pred_check_branch
          %503 = sbr.rel (%p501) target = $region68
        $region67: #{tpu_custom_call.1} parent=55 // pred_region
          %s504 = sand.u32 %s31, 1
          %s505 = scalar_lea.sflag [#allocation6], %s504
          %s506 = sand.u32 %s93, 1
          %s507 = smul.addr %s506, 8
          %s508 = scalar_lea.vmem [#allocation5], %s507
          %510 = vsyncadd %s505, 0
          %s511 = smul.addr %s31, 8
          %s512 = scalar_lea.hbm %s2, %s511
          %s514 = sshll.u32 %s512, 4
          %s515 = int_to_ptr.hbm [resolvable:$true] %s514
          %s516 = sshll.u32 %s508, 4
          %s517 = int_to_ptr.vmem [resolvable:$true] %s516
          %519 = dma.hbm_to_vmem [thread:$0]  %s515, 128, %s517, %s505
        $region68: #{tpu_custom_call.1} parent=55 // pred_fallthru
          _
        // Predicated region
        $region69: #{tpu_custom_call.1} parent=55 // pred_check
          %p520 = pneg %p129
        $region70: #{tpu_custom_call.1} parent=55 // pred_check_branch
          %522 = sbr.rel (%p520) target = $region72
        $region71: #{tpu_custom_call.1} parent=55 // pred_region
          %p523 = scmp.lt.s32.totalorder %s31, 3
          %s524 = scalar_select %p523, %s31, 3
          %s525 = scalar_lea.vmem %s3, %s524
        $region72: #{tpu_custom_call.1} parent=55 // pred_fallthru
          _
      $region56: #{tpu_custom_call.1} parent=5 // pred_fallthru
        _
      %p526 = scmp.le.s32.totalorder 1, %s31
      %p527 = scmp.lt.s32.totalorder %s31, 5
      %p528 = pnand %p526, %p527
      %p529 = pneg %p528
      // Predicated region
      $region73: #{tpu_custom_call.1} parent=5 // pred_check
        _
      $region74: #{tpu_custom_call.1} parent=5 // pred_check_branch
        %531 = sbr.rel (%p528) target = $region76
      $region75: #{tpu_custom_call.1} parent=5 // pred_region
        %s532 = ssub.s32 %s31, 1
        %s533 = sand.u32 %s70, 1
        %s534 = scalar_lea.sflag [#allocation3], %s533
        %s535 = sand.u32 %s70, 1
        %s536 = smul.addr %s535, 8
        %s537 = scalar_lea.vmem [#allocation2], %s536
        // Predicated region
        $region77: #{tpu_custom_call.1} parent=75 // pred_check
          %p538 = pneg %p83
        $region78: #{tpu_custom_call.1} parent=75 // pred_check_branch
          %540 = sbr.rel (%p538) target = $region80
        $region79: #{tpu_custom_call.1} parent=75 // pred_region
          %542 = dma.done %s534, 128
        $region80: #{tpu_custom_call.1} parent=75 // pred_fallthru
          _
        %s543 = sand.u32 %s36, 1
        %s544 = scalar_lea.sflag [#allocation6], %s543
        %s545 = sand.u32 %s96, 1
        %s546 = smul.addr %s545, 8
        %s547 = scalar_lea.vmem [#allocation5], %s546
        // Predicated region
        $region81: #{tpu_custom_call.1} parent=75 // pred_check
          %p548 = pneg %p109
        $region82: #{tpu_custom_call.1} parent=75 // pred_check_branch
          %550 = sbr.rel (%p548) target = $region84
        $region83: #{tpu_custom_call.1} parent=75 // pred_region
          %552 = dma.done %s544, 128
        $region84: #{tpu_custom_call.1} parent=75 // pred_fallthru
          _
        // Predicated region
        $region85: #{tpu_custom_call.1} parent=75 // pred_check
          %p553 = pneg %p156
        $region86: #{tpu_custom_call.1} parent=75 // pred_check_branch
          %555 = sbr.rel (%p553) target = $region88
        $region87: #{tpu_custom_call.1} parent=75 // pred_region
          %557 = dma.done [#allocation6], 256
        $region88: #{tpu_custom_call.1} parent=75 // pred_fallthru
          _
        // Predicated region
        $region89: #{tpu_custom_call.1} parent=75 // pred_check
          %p558 = pneg %p177
        $region90: #{tpu_custom_call.1} parent=75 // pred_check_branch
          %560 = sbr.rel (%p558) target = $region92
        $region91: #{tpu_custom_call.1} parent=75 // pred_region
          %562 = dma.done [#allocation9], 512
        $region92: #{tpu_custom_call.1} parent=75 // pred_fallthru
          _
        // Predicated region
        $region93: #{tpu_custom_call.1} parent=75 // pred_check
          %p563 = pneg %p219
        $region94: #{tpu_custom_call.1} parent=75 // pred_check_branch
          %565 = sbr.rel (%p563) target = $region96
        $region95: #{tpu_custom_call.1} parent=75 // pred_region
          %567 = dma.done [#allocation9], 512
        $region96: #{tpu_custom_call.1} parent=75 // pred_fallthru
          _
        // Predicated region
        $region97: #{tpu_custom_call.1} parent=75 // pred_check
          %p568 = pneg %p240
        $region98: #{tpu_custom_call.1} parent=75 // pred_check_branch
          %570 = sbr.rel (%p568) target = $region100
        $region99: #{tpu_custom_call.1} parent=75 // pred_region
          %572 = dma.done [#allocation12], 512
        $region100: #{tpu_custom_call.1} parent=75 // pred_fallthru
          _
        // Predicated region
        $region101: #{tpu_custom_call.1} parent=75 // pred_check
          %p573 = pneg %p303
        $region102: #{tpu_custom_call.1} parent=75 // pred_check_branch
          %575 = sbr.rel (%p573) target = $region104
        $region103: #{tpu_custom_call.1} parent=75 // pred_region
          %577 = dma.done [#allocation12], 512
        $region104: #{tpu_custom_call.1} parent=75 // pred_fallthru
          _
        %p578 = scmp.lt.s32.totalorder %s36, 3
        %s579 = scalar_select %p578, %s36, 3
        %s580 = smul.addr %s579, 8
        %s581 = scalar_lea.vmem %s0, %s580
        %p582 = pneg %p57
        %p583 = pneg %p54
        %s584 = sand.u32 %s70, 1
        %s585 = scalar_lea.sflag [#allocation3], %s584
        %s586 = sand.u32 %s70, 1
        %s587 = smul.addr %s586, 8
        %s588 = scalar_lea.vmem [#allocation2], %s587
        %p589 = pneg %p83
        %p590 = pneg %p80
        %s591 = sand.u32 %s36, 1
        %s592 = scalar_lea.sflag [#allocation6], %s591
        %s593 = sand.u32 %s96, 1
        %s594 = smul.addr %s593, 8
        %s595 = scalar_lea.vmem [#allocation5], %s594
        %p596 = pneg %p109
        %p597 = pneg %p106
        %p598 = scmp.lt.s32.totalorder %s36, 3
        %s599 = scalar_select %p598, %s36, 3
        %s600 = scalar_lea.vmem %s3, %s599
        %p601 = pneg %p135
        %p602 = pneg %p132
        %p603 = pneg %p156
        %p604 = pneg %p153
        %p605 = pneg %p177
        %p606 = pneg %p174
        %p607 = pneg %p198
        %p608 = pneg %p195
        %p609 = pneg %p219
        %p610 = pneg %p216
        %p611 = pneg %p240
        %p612 = pneg %p237
        %p613 = pneg %p261
        %p614 = pneg %p258
        %p615 = pneg %p282
        %p616 = pneg %p279
        %p617 = pneg %p303
        %p618 = pneg %p300
        %p619 = pneg %p324
        %p620 = pneg %p321
        %p621 = pneg %p345
        %p622 = pneg %p342
        %p623 = pneg %p371
        %p624 = pneg %p368
        %s625 = sand.u32 %s358, 1
        %s626 = scalar_lea.sflag [#allocation4], %s625
        %s627 = sand.u32 %s358, 1
        %s628 = smul.addr %s627, 8
        %s629 = scalar_lea.vmem [#allocation14], %s628
        %p630 = scmp.lt.s32.totalorder %s36, 3
        %s631 = scalar_select %p630, %s36, 3
        %s632 = smul.addr %s631, 8
        %s633 = scalar_lea.vmem %s0, %s632
        %p634 = scmp.lt.s32.totalorder %s36, 3
        %s635 = scalar_select %p634, %s36, 3
        %s636 = scalar_lea.vmem %s3, %s635
        %v637 = vld [vmem:[%s633] sm:$0xff]
        %v638 = vld [vmem:[%s537] sm:$0xff]
        %v639 = vld [vmem:[%s547] sm:$0xff]
        %v640 = vld [vmem:[%s636] sm:$0x1]
        %v641 = vld [vmem:[#allocation7] sm:$0xff]
        %v642 = vld [vmem:[#allocation7 + $0x8] sm:$0x3]
        %vm643 = vcmask 261120
        %v644 = vsel %vm643, %v637, 0.0
        %645 = vadd.xlane.f32.xlu0 %v644
        %v646 = vpop.xlane.xlu0 %645
        %v647 = vrcp.pop 32.0
        %v648 = vmul.f32 32.0, %v647
        %v649 = vsub.f32 1.0, %v648
        %v650 = vmul.f32 %v647, %v649
        %v651 = vadd.f32 %v647, %v650
        %vm652 = vweird.f32 %v647
        %v653 = vsel %vm652, %v647, %v651
        %v654 = vmul.f32 %v646, %v653
        %v655 = vsub.f32 %v637, %v654
        %v656 = vmul.f32 %v655, %v655
        %v657 = vsel %vm643, %v656, 0.0
        %658 = vadd.xlane.f32.xlu0 %v657
        %v659 = vpop.xlane.xlu0 %658
        %v660 = vmul.f32 %v659, 0.032258064
        %v661 = vrsqrt.pop %v660
        %v662 = vmul.f32 %v661, %v660
        %v663 = vmul.f32 %v662, %v661
        %v664 = vmul.f32 0.5, %v663
        %v665 = vsub.f32 1.5, %v664
        %v666 = vmul.f32 %v661, %v665
        %v667 = vmul.f32 %v660, %v666
        %vm668 = vcmp.eq.f32.partialorder %v660, inf
        %v669 = vsel %vm668, %v660, %v667
        %vm670 = vcmp.eq.f32.partialorder %v660, 0.0
        %v671 = vand.u32 %v660, 2147483648
        %v672 = vsel %vm670, %v671, %v669
        %v673 = vadd.f32 %v672, 1e-06
        %v674 = vrcp.pop %v673
        %v675 = vmul.f32 %v673, %v674
        %v676 = vsub.f32 1.0, %v675
        %v677 = vmul.f32 %v674, %v676
        %v678 = vadd.f32 %v674, %v677
        %vm679 = vweird.f32 %v673
        %vm680 = vweird.f32 %v674
        %vm681 = vmor %vm679, %vm680
        %v682 = vsel %vm681, %v674, %v678
        %v683 = vand.u32 2147483647, %v673
        %vm684 = vcmp.eq.f32.partialorder %v683, 8.507059e+37
        %v685 = vand.u32 %v673, 2147483648
        %v686 = vor.u32 1.1754944e-38, %v685
        %v687 = vsel %vm684, %v686, %v682
        %v688 = vmul.f32 %v655, %v687
        %v689 = vperm.slane %v641, 0
        %v690 = vmul.f32 %v689, %v688
        %v691 = vperm.slane %v641, 1
        %v692 = vadd.f32 %v690, %v691
        %v693 = vld [vmem:[#allocation8] sm:$0xff]
        %v694 = vld [vmem:[#allocation8 + $0x8] sm:$0xff]
        %v695 = vld [vmem:[#allocation8 + $0x10] sm:$0xff]
        %v696 = vld [vmem:[#allocation8 + $0x18] sm:$0xff]
        %v697 = vld [vmem:[%s6] sm:$0x1]
        %v699 = vperm.slane %v697, 0
        %v702 = vsel %vm643, %v692, 0
        %704 = vmatpush.msra.mxu0 0.0
        %705 = vmatpush.msra.mxu0 0.0
        %706 = vmatpush.msra.mxu0 0.0
        %707 = vmatpush.msra.mxu0 0.0
        %708 = vmatpush.msra.mxu0 0.0
        %709 = vmatpush.msra.mxu0 0.0
        %710 = vmatpush.msra.mxu0 0.0
        %711 = vmatpush.msra.mxu0 0.0
        %712 = vmatpush.msra.mxu0 0.0
        %713 = vmatpush.msra.mxu0 0.0
        %714 = vmatpush.msra.mxu0 0.0
        %715 = vmatpush.msra.mxu0 0.0
        %716 = vmatpush.msra.mxu0 %v696
        %717 = vmatpush.msra.mxu0 %v695
        %718 = vmatpush.msra.mxu0 %v694
        %719 = vmatpush.msra.mxu0 %v693
        %720 = vmatmul.f32.gmra.mxu0 %v702
        %v721 = vpop.f32.mrf.mxu0
        %v722 = vadd.f32 %v699, %v721
        %723 = vdwg.mxu0
        %725 = vrot.lane.b32.xlu0 %v722, 120
        %v726 = vpop.permute.xlu0 %725
        %727 = vrot.lane.b32.xlu0 %v722, 112
        %v728 = vpop.permute.xlu0 %727
        %729 = vrot.lane.b32.xlu0 %v722, 104
        %v730 = vpop.permute.xlu0 %729
        %v731 = vld [vmem:[%s10] sm:$0xff]
        %v732 = vld [vmem:[%s10 + $0x8] sm:$0xff]
        %v733 = vld [vmem:[%s10 + $0x10] sm:$0xff]
        %v734 = vld [vmem:[%s10 + $0x18] sm:$0xff]
        %735 = vrot.lane.b32.xlu0 %v722, 96
        %v736 = vpop.permute.xlu0 %735
        %vm737 = vcmask 64512
        %v738 = vsel %vm737, %v722, 0
        %v740 = vsel %vm737, %v736, 0
        %742 = vmatpush.xpose.msra.mxu0 0.0
        %743 = vmatpush.xpose.msra.mxu0 0.0
        %744 = vmatpush.xpose.msra.mxu0 0.0
        %745 = vmatpush.xpose.msra.mxu0 0.0
        %746 = vmatpush.xpose.msra.mxu0 0.0
        %747 = vmatpush.xpose.msra.mxu0 0.0
        %748 = vmatpush.xpose.msra.mxu0 0.0
        %749 = vmatpush.xpose.msra.mxu0 0.0
        %750 = vmatpush.xpose.msra.mxu0 0.0
        %751 = vmatpush.xpose.msra.mxu0 0.0
        %752 = vmatpush.xpose.msra.mxu0 0.0
        %753 = vmatpush.xpose.msra.mxu0 0.0
        %754 = vmatpush.xpose.msra.mxu0 0.0
        %755 = vmatpush.xpose.msra.mxu0 0.0
        %756 = vmatpush.xpose.msra.mxu0 0.0
        %757 = vmatpush.xpose.msra.mxu0 %v740
        %758 = vmatmul.f32.gmra.mxu0 %v738
        %v759 = vpop.f32.mrf.mxu0
        %v760 = vadd.f32 0.0, %v759
        %761 = vdwg.mxu0
        %762 = vrot.lane.b32.xlu0 %v726, 96
        %v763 = vpop.permute.xlu0 %762
        %v764 = vsel %vm737, %v726, 0
        %v766 = vsel %vm737, %v763, 0
        %768 = vmatpush.xpose.msra.mxu0 0.0
        %769 = vmatpush.xpose.msra.mxu0 0.0
        %770 = vmatpush.xpose.msra.mxu0 0.0
        %771 = vmatpush.xpose.msra.mxu0 0.0
        %772 = vmatpush.xpose.msra.mxu0 0.0
        %773 = vmatpush.xpose.msra.mxu0 0.0
        %774 = vmatpush.xpose.msra.mxu0 0.0
        %775 = vmatpush.xpose.msra.mxu0 0.0
        %776 = vmatpush.xpose.msra.mxu0 0.0
        %777 = vmatpush.xpose.msra.mxu0 0.0
        %778 = vmatpush.xpose.msra.mxu0 0.0
        %779 = vmatpush.xpose.msra.mxu0 0.0
        %780 = vmatpush.xpose.msra.mxu0 0.0
        %781 = vmatpush.xpose.msra.mxu0 0.0
        %782 = vmatpush.xpose.msra.mxu0 0.0
        %783 = vmatpush.xpose.msra.mxu0 %v766
        %784 = vmatmul.f32.gmra.mxu0 %v764
        %v785 = vpop.f32.mrf.mxu0
        %v786 = vadd.f32 0.0, %v785
        %787 = vdwg.mxu0
        %788 = vrot.lane.b32.xlu0 %v728, 96
        %v789 = vpop.permute.xlu0 %788
        %v790 = vsel %vm737, %v728, 0
        %v792 = vsel %vm737, %v789, 0
        %794 = vmatpush.xpose.msra.mxu0 0.0
        %795 = vmatpush.xpose.msra.mxu0 0.0
        %796 = vmatpush.xpose.msra.mxu0 0.0
        %797 = vmatpush.xpose.msra.mxu0 0.0
        %798 = vmatpush.xpose.msra.mxu0 0.0
        %799 = vmatpush.xpose.msra.mxu0 0.0
        %800 = vmatpush.xpose.msra.mxu0 0.0
        %801 = vmatpush.xpose.msra.mxu0 0.0
        %802 = vmatpush.xpose.msra.mxu0 0.0
        %803 = vmatpush.xpose.msra.mxu0 0.0
        %804 = vmatpush.xpose.msra.mxu0 0.0
        %805 = vmatpush.xpose.msra.mxu0 0.0
        %806 = vmatpush.xpose.msra.mxu0 0.0
        %807 = vmatpush.xpose.msra.mxu0 0.0
        %808 = vmatpush.xpose.msra.mxu0 0.0
        %809 = vmatpush.xpose.msra.mxu0 %v792
        %810 = vmatmul.f32.gmra.mxu0 %v790
        %v811 = vpop.f32.mrf.mxu0
        %v812 = vadd.f32 0.0, %v811
        %813 = vdwg.mxu0
        %814 = vrot.lane.b32.xlu0 %v730, 96
        %v815 = vpop.permute.xlu0 %814
        %v816 = vsel %vm737, %v730, 0
        %v818 = vsel %vm737, %v815, 0
        %820 = vmatpush.xpose.msra.mxu0 0.0
        %821 = vmatpush.xpose.msra.mxu0 0.0
        %822 = vmatpush.xpose.msra.mxu0 0.0
        %823 = vmatpush.xpose.msra.mxu0 0.0
        %824 = vmatpush.xpose.msra.mxu0 0.0
        %825 = vmatpush.xpose.msra.mxu0 0.0
        %826 = vmatpush.xpose.msra.mxu0 0.0
        %827 = vmatpush.xpose.msra.mxu0 0.0
        %828 = vmatpush.xpose.msra.mxu0 0.0
        %829 = vmatpush.xpose.msra.mxu0 0.0
        %830 = vmatpush.xpose.msra.mxu0 0.0
        %831 = vmatpush.xpose.msra.mxu0 0.0
        %832 = vmatpush.xpose.msra.mxu0 0.0
        %833 = vmatpush.xpose.msra.mxu0 0.0
        %834 = vmatpush.xpose.msra.mxu0 0.0
        %835 = vmatpush.xpose.msra.mxu0 %v818
        %836 = vmatmul.f32.gmra.mxu0 %v816
        %v837 = vpop.f32.mrf.mxu0
        %v838 = vadd.f32 0.0, %v837
        %839 = vdwg.mxu0
        %v840 = vadd.f32 %v760, %v639
        %v841 = vadd.f32 %v786, %v639
        %v842 = vadd.f32 %v812, %v639
        %v843 = vadd.f32 %v838, %v639
        %v844 = vsel %vm737, %v840, -inf
        %845 = vmax.xlane.f32.xlu0 %v844
        %v846 = vpop.xlane.xlu0 %845
        %v847 = vsel %vm737, %v841, -inf
        %848 = vmax.xlane.f32.xlu0 %v847
        %v849 = vpop.xlane.xlu0 %848
        %v850 = vsel %vm737, %v842, -inf
        %851 = vmax.xlane.f32.xlu0 %v850
        %v852 = vpop.xlane.xlu0 %851
        %v853 = vsel %vm737, %v843, -inf
        %854 = vmax.xlane.f32.xlu0 %v853
        %v855 = vpop.xlane.xlu0 %854
        %v856 = vsub.f32 %v840, %v846
        %v857 = vsub.f32 %v841, %v849
        %v858 = vsub.f32 %v842, %v852
        %v859 = vsub.f32 %v843, %v855
        %v860 = vmul.f32 %v856, 1.442695
        %v861 = vpow.pop %v860
        %v862 = vmul.f32 %v857, 1.442695
        %v863 = vpow.pop %v862
        %v864 = vmul.f32 %v858, 1.442695
        %v865 = vpow.pop %v864
        %v866 = vmul.f32 %v859, 1.442695
        %v867 = vpow.pop %v866
        %v868 = vsel %vm737, %v861, 0.0
        %869 = vadd.xlane.f32.xlu0 %v868
        %v870 = vpop.xlane.xlu0 %869
        %v871 = vsel %vm737, %v863, 0.0
        %872 = vadd.xlane.f32.xlu0 %v871
        %v873 = vpop.xlane.xlu0 %872
        %v874 = vsel %vm737, %v865, 0.0
        %875 = vadd.xlane.f32.xlu0 %v874
        %v876 = vpop.xlane.xlu0 %875
        %v877 = vsel %vm737, %v867, 0.0
        %878 = vadd.xlane.f32.xlu0 %v877
        %v879 = vpop.xlane.xlu0 %878
        %v880 = vrcp.pop %v870
        %v881 = vrcp.pop %v873
        %v882 = vrcp.pop %v876
        %v883 = vrcp.pop %v879
        %v884 = vmul.f32 %v861, %v880
        %v885 = vmul.f32 %v863, %v881
        %v886 = vmul.f32 %v865, %v882
        %v887 = vmul.f32 %v867, %v883
        %888 = vrot.lane.b32.xlu0 %v722, 64
        %v889 = vpop.permute.xlu0 %888
        %v892 = vsel %vm737, %v884, 0
        %894 = vmatpush.msra.mxu0 0.0
        %895 = vmatpush.msra.mxu0 0.0
        %896 = vmatpush.msra.mxu0 0.0
        %897 = vmatpush.msra.mxu0 0.0
        %898 = vmatpush.msra.mxu0 0.0
        %899 = vmatpush.msra.mxu0 0.0
        %900 = vmatpush.msra.mxu0 0.0
        %901 = vmatpush.msra.mxu0 0.0
        %902 = vmatpush.msra.mxu0 0.0
        %903 = vmatpush.msra.mxu0 0.0
        %904 = vmatpush.msra.mxu0 0.0
        %905 = vmatpush.msra.mxu0 0.0
        %906 = vmatpush.msra.mxu0 0.0
        %907 = vmatpush.msra.mxu0 0.0
        %908 = vmatpush.msra.mxu0 0.0
        %909 = vmatpush.msra.mxu0 %v889
        %910 = vmatmul.f32.gmra.mxu0 %v892
        %v911 = vpop.f32.mrf.mxu0
        %v912 = vadd.f32 0.0, %v911
        %913 = vdwg.mxu0
        %914 = vrot.lane.b32.xlu0 %v726, 64
        %v915 = vpop.permute.xlu0 %914
        %v918 = vsel %vm737, %v885, 0
        %920 = vmatpush.msra.mxu0 0.0
        %921 = vmatpush.msra.mxu0 0.0
        %922 = vmatpush.msra.mxu0 0.0
        %923 = vmatpush.msra.mxu0 0.0
        %924 = vmatpush.msra.mxu0 0.0
        %925 = vmatpush.msra.mxu0 0.0
        %926 = vmatpush.msra.mxu0 0.0
        %927 = vmatpush.msra.mxu0 0.0
        %928 = vmatpush.msra.mxu0 0.0
        %929 = vmatpush.msra.mxu0 0.0
        %930 = vmatpush.msra.mxu0 0.0
        %931 = vmatpush.msra.mxu0 0.0
        %932 = vmatpush.msra.mxu0 0.0
        %933 = vmatpush.msra.mxu0 0.0
        %934 = vmatpush.msra.mxu0 0.0
        %935 = vmatpush.msra.mxu0 %v915
        %936 = vmatmul.f32.gmra.mxu0 %v918
        %v937 = vpop.f32.mrf.mxu0
        %v938 = vadd.f32 0.0, %v937
        %939 = vdwg.mxu0
        %940 = vrot.lane.b32.xlu0 %v728, 64
        %v941 = vpop.permute.xlu0 %940
        %v944 = vsel %vm737, %v886, 0
        %946 = vmatpush.msra.mxu0 0.0
        %947 = vmatpush.msra.mxu0 0.0
        %948 = vmatpush.msra.mxu0 0.0
        %949 = vmatpush.msra.mxu0 0.0
        %950 = vmatpush.msra.mxu0 0.0
        %951 = vmatpush.msra.mxu0 0.0
        %952 = vmatpush.msra.mxu0 0.0
        %953 = vmatpush.msra.mxu0 0.0
        %954 = vmatpush.msra.mxu0 0.0
        %955 = vmatpush.msra.mxu0 0.0
        %956 = vmatpush.msra.mxu0 0.0
        %957 = vmatpush.msra.mxu0 0.0
        %958 = vmatpush.msra.mxu0 0.0
        %959 = vmatpush.msra.mxu0 0.0
        %960 = vmatpush.msra.mxu0 0.0
        %961 = vmatpush.msra.mxu0 %v941
        %962 = vmatmul.f32.gmra.mxu0 %v944
        %v963 = vpop.f32.mrf.mxu0
        %v964 = vadd.f32 0.0, %v963
        %965 = vdwg.mxu0
        %966 = vrot.lane.b32.xlu0 %v730, 64
        %v967 = vpop.permute.xlu0 %966
        %v970 = vsel %vm737, %v887, 0
        %972 = vmatpush.msra.mxu0 0.0
        %973 = vmatpush.msra.mxu0 0.0
        %974 = vmatpush.msra.mxu0 0.0
        %975 = vmatpush.msra.mxu0 0.0
        %976 = vmatpush.msra.mxu0 0.0
        %977 = vmatpush.msra.mxu0 0.0
        %978 = vmatpush.msra.mxu0 0.0
        %979 = vmatpush.msra.mxu0 0.0
        %980 = vmatpush.msra.mxu0 0.0
        %981 = vmatpush.msra.mxu0 0.0
        %982 = vmatpush.msra.mxu0 0.0
        %983 = vmatpush.msra.mxu0 0.0
        %984 = vmatpush.msra.mxu0 0.0
        %985 = vmatpush.msra.mxu0 0.0
        %986 = vmatpush.msra.mxu0 0.0
        %987 = vmatpush.msra.mxu0 %v967
        %988 = vmatmul.f32.gmra.mxu0 %v970
        %v989 = vpop.f32.mrf.mxu0
        %v990 = vadd.f32 0.0, %v989
        %991 = vdwg.mxu0
        %v993 = vsel %vm737, %v912, 0
        %995 = vmatpush.msra.mxu0 0.0
        %996 = vmatpush.msra.mxu0 0.0
        %997 = vmatpush.msra.mxu0 0.0
        %998 = vmatpush.msra.mxu0 0.0
        %999 = vmatpush.msra.mxu0 0.0
        %1000 = vmatpush.msra.mxu0 0.0
        %1001 = vmatpush.msra.mxu0 0.0
        %1002 = vmatpush.msra.mxu0 0.0
        %1003 = vmatpush.msra.mxu0 0.0
        %1004 = vmatpush.msra.mxu0 0.0
        %1005 = vmatpush.msra.mxu0 0.0
        %1006 = vmatpush.msra.mxu0 0.0
        %1007 = vmatpush.msra.mxu0 0.0
        %1008 = vmatpush.msra.mxu0 0.0
        %1009 = vmatpush.msra.mxu0 0.0
        %1010 = vmatpush.msra.mxu0 %v731
        %1011 = vmatmul.f32.gmra.mxu0 %v993
        %v1012 = vpop.f32.mrf.mxu0
        %v1013 = vadd.f32 0.0, %v1012
        %1014 = vdwg.mxu0
        %v1016 = vsel %vm737, %v938, 0
        %1018 = vmatpush.msra.mxu0 0.0
        %1019 = vmatpush.msra.mxu0 0.0
        %1020 = vmatpush.msra.mxu0 0.0
        %1021 = vmatpush.msra.mxu0 0.0
        %1022 = vmatpush.msra.mxu0 0.0
        %1023 = vmatpush.msra.mxu0 0.0
        %1024 = vmatpush.msra.mxu0 0.0
        %1025 = vmatpush.msra.mxu0 0.0
        %1026 = vmatpush.msra.mxu0 0.0
        %1027 = vmatpush.msra.mxu0 0.0
        %1028 = vmatpush.msra.mxu0 0.0
        %1029 = vmatpush.msra.mxu0 0.0
        %1030 = vmatpush.msra.mxu0 0.0
        %1031 = vmatpush.msra.mxu0 0.0
        %1032 = vmatpush.msra.mxu0 0.0
        %1033 = vmatpush.msra.mxu0 %v732
        %1034 = vmatmul.f32.gmra.mxu0 %v1016
        %v1035 = vpop.f32.mrf.mxu0
        %v1036 = vadd.f32 0.0, %v1035
        %1037 = vdwg.mxu0
        %v1039 = vsel %vm737, %v964, 0
        %1041 = vmatpush.msra.mxu0 0.0
        %1042 = vmatpush.msra.mxu0 0.0
        %1043 = vmatpush.msra.mxu0 0.0
        %1044 = vmatpush.msra.mxu0 0.0
        %1045 = vmatpush.msra.mxu0 0.0
        %1046 = vmatpush.msra.mxu0 0.0
        %1047 = vmatpush.msra.mxu0 0.0
        %1048 = vmatpush.msra.mxu0 0.0
        %1049 = vmatpush.msra.mxu0 0.0
        %1050 = vmatpush.msra.mxu0 0.0
        %1051 = vmatpush.msra.mxu0 0.0
        %1052 = vmatpush.msra.mxu0 0.0
        %1053 = vmatpush.msra.mxu0 0.0
        %1054 = vmatpush.msra.mxu0 0.0
        %1055 = vmatpush.msra.mxu0 0.0
        %1056 = vmatpush.msra.mxu0 %v733
        %1057 = vmatmul.f32.gmra.mxu0 %v1039
        %v1058 = vpop.f32.mrf.mxu0
        %v1059 = vadd.f32 0.0, %v1058
        %1060 = vdwg.mxu0
        %v1062 = vsel %vm737, %v990, 0
        %1064 = vmatpush.msra.mxu0 0.0
        %1065 = vmatpush.msra.mxu0 0.0
        %1066 = vmatpush.msra.mxu0 0.0
        %1067 = vmatpush.msra.mxu0 0.0
        %1068 = vmatpush.msra.mxu0 0.0
        %1069 = vmatpush.msra.mxu0 0.0
        %1070 = vmatpush.msra.mxu0 0.0
        %1071 = vmatpush.msra.mxu0 0.0
        %1072 = vmatpush.msra.mxu0 0.0
        %1073 = vmatpush.msra.mxu0 0.0
        %1074 = vmatpush.msra.mxu0 0.0
        %1075 = vmatpush.msra.mxu0 0.0
        %1076 = vmatpush.msra.mxu0 0.0
        %1077 = vmatpush.msra.mxu0 0.0
        %1078 = vmatpush.msra.mxu0 0.0
        %1079 = vmatpush.msra.mxu0 %v734
        %1080 = vmatmul.f32.gmra.mxu0 %v1062
        %v1081 = vpop.f32.mrf.mxu0
        %v1082 = vadd.f32 0.0, %v1081
        %1083 = vdwg.mxu0
        %v1084 = vadd.f32 %v1013, %v1036
        %v1085 = vadd.f32 %v1084, %v1059
        %v1086 = vadd.f32 %v1085, %v1082
        %v1087 = vperm.slane %v641, 6
        %v1088 = vadd.f32 %v1086, %v1087
        %v1089 = vadd.f32 %v637, %v1088
        %v1090 = vsel %vm643, %v1089, 0.0
        %1091 = vadd.xlane.f32.xlu0 %v1090
        %v1092 = vpop.xlane.xlu0 %1091
        %v1093 = vmul.f32 %v1092, %v653
        %v1094 = vsub.f32 %v1089, %v1093
        %v1095 = vmul.f32 %v1094, %v1094
        %v1096 = vsel %vm643, %v1095, 0.0
        %1097 = vadd.xlane.f32.xlu0 %v1096
        %v1098 = vpop.xlane.xlu0 %1097
        %v1099 = vmul.f32 %v1098, 0.032258064
        %v1100 = vrsqrt.pop %v1099
        %v1101 = vmul.f32 %v1100, %v1099
        %v1102 = vmul.f32 %v1101, %v1100
        %v1103 = vmul.f32 0.5, %v1102
        %v1104 = vsub.f32 1.5, %v1103
        %v1105 = vmul.f32 %v1100, %v1104
        %v1106 = vmul.f32 %v1099, %v1105
        %vm1107 = vcmp.eq.f32.partialorder %v1099, inf
        %v1108 = vsel %vm1107, %v1099, %v1106
        %vm1109 = vcmp.eq.f32.partialorder %v1099, 0.0
        %v1110 = vand.u32 %v1099, 2147483648
        %v1111 = vsel %vm1109, %v1110, %v1108
        %v1112 = vadd.f32 %v1111, 1e-06
        %v1113 = vrcp.pop %v1112
        %v1114 = vmul.f32 %v1112, %v1113
        %v1115 = vsub.f32 1.0, %v1114
        %v1116 = vmul.f32 %v1113, %v1115
        %v1117 = vadd.f32 %v1113, %v1116
        %vm1118 = vweird.f32 %v1112
        %vm1119 = vweird.f32 %v1113
        %vm1120 = vmor %vm1118, %vm1119
        %v1121 = vsel %vm1120, %v1113, %v1117
        %v1122 = vand.u32 2147483647, %v1112
        %vm1123 = vcmp.eq.f32.partialorder %v1122, 8.507059e+37
        %v1124 = vand.u32 %v1112, 2147483648
        %v1125 = vor.u32 1.1754944e-38, %v1124
        %v1126 = vsel %vm1123, %v1125, %v1121
        %v1127 = vmul.f32 %v1094, %v1126
        %v1128 = vperm.slane %v641, 2
        %v1129 = vmul.f32 %v1128, %v1127
        %v1130 = vperm.slane %v641, 3
        %v1131 = vadd.f32 %v1129, %v1130
        %v1132 = vld [vmem:[#allocation10] sm:$0xff]
        %v1133 = vld [vmem:[#allocation10 + $0x8] sm:$0xff]
        %v1134 = vld [vmem:[#allocation10 + $0x10] sm:$0xff]
        %v1135 = vld [vmem:[#allocation10 + $0x18] sm:$0xff]
        %v1136 = vperm.slane %v642, 1
        %v1138 = vsel %vm643, %v1131, 0
        %1140 = vmatpush.msra.mxu0 0.0
        %1141 = vmatpush.msra.mxu0 0.0
        %1142 = vmatpush.msra.mxu0 0.0
        %1143 = vmatpush.msra.mxu0 0.0
        %1144 = vmatpush.msra.mxu0 0.0
        %1145 = vmatpush.msra.mxu0 0.0
        %1146 = vmatpush.msra.mxu0 0.0
        %1147 = vmatpush.msra.mxu0 0.0
        %1148 = vmatpush.msra.mxu0 0.0
        %1149 = vmatpush.msra.mxu0 0.0
        %1150 = vmatpush.msra.mxu0 0.0
        %1151 = vmatpush.msra.mxu0 0.0
        %1152 = vmatpush.msra.mxu0 %v1135
        %1153 = vmatpush.msra.mxu0 %v1134
        %1154 = vmatpush.msra.mxu0 %v1133
        %1155 = vmatpush.msra.mxu0 %v1132
        %1156 = vmatmul.f32.gmra.mxu0 %v1138
        %v1157 = vpop.f32.mrf.mxu0
        %v1158 = vadd.f32 %v1136, %v1157
        %1159 = vdwg.mxu0
        %v1160 = vld [vmem:[#allocation11] sm:$0xff]
        %v1161 = vld [vmem:[#allocation11 + $0x8] sm:$0xff]
        %v1162 = vld [vmem:[#allocation11 + $0x10] sm:$0xff]
        %v1163 = vld [vmem:[#allocation11 + $0x18] sm:$0xff]
        %v1164 = vld [vmem:[%s9] sm:$0x1]
        %v1166 = vperm.slane %v1164, 0
        %v1169 = vsel %vm643, %v638, 0
        %1171 = vmatpush.msra.mxu0 0.0
        %1172 = vmatpush.msra.mxu0 0.0
        %1173 = vmatpush.msra.mxu0 0.0
        %1174 = vmatpush.msra.mxu0 0.0
        %1175 = vmatpush.msra.mxu0 0.0
        %1176 = vmatpush.msra.mxu0 0.0
        %1177 = vmatpush.msra.mxu0 0.0
        %1178 = vmatpush.msra.mxu0 0.0
        %1179 = vmatpush.msra.mxu0 0.0
        %1180 = vmatpush.msra.mxu0 0.0
        %1181 = vmatpush.msra.mxu0 0.0
        %1182 = vmatpush.msra.mxu0 0.0
        %1183 = vmatpush.msra.mxu0 %v1163
        %1184 = vmatpush.msra.mxu0 %v1162
        %1185 = vmatpush.msra.mxu0 %v1161
        %1186 = vmatpush.msra.mxu0 %v1160
        %1187 = vmatmul.f32.gmra.mxu0 %v1169
        %v1188 = vpop.f32.mrf.mxu0
        %v1189 = vadd.f32 %v1166, %v1188
        %1190 = vdwg.mxu0
        %1192 = vrot.lane.b32.xlu0 %v1158, 120
        %v1193 = vpop.permute.xlu0 %1192
        %1194 = vrot.lane.b32.xlu0 %v1158, 112
        %v1195 = vpop.permute.xlu0 %1194
        %1196 = vrot.lane.b32.xlu0 %v1158, 104
        %v1197 = vpop.permute.xlu0 %1196
        %1199 = vrot.lane.b32.xlu0 %v1189, 120
        %v1200 = vpop.permute.xlu0 %1199
        %1201 = vrot.lane.b32.xlu0 %v1189, 112
        %v1202 = vpop.permute.xlu0 %1201
        %1203 = vrot.lane.b32.xlu0 %v1189, 104
        %v1204 = vpop.permute.xlu0 %1203
        %s1205 = scalar_lea.vmem %s10, 32
        %v1206 = vld [vmem:[%s1205] sm:$0xff]
        %v1207 = vld [vmem:[%s1205 + $0x8] sm:$0xff]
        %v1208 = vld [vmem:[%s1205 + $0x10] sm:$0xff]
        %v1209 = vld [vmem:[%s1205 + $0x18] sm:$0xff]
        %v1210 = vsel %vm737, %v1158, 0
        %v1212 = vsel %vm737, %v1189, 0
        %1214 = vmatpush.xpose.msra.mxu0 0.0
        %1215 = vmatpush.xpose.msra.mxu0 0.0
        %1216 = vmatpush.xpose.msra.mxu0 0.0
        %1217 = vmatpush.xpose.msra.mxu0 0.0
        %1218 = vmatpush.xpose.msra.mxu0 0.0
        %1219 = vmatpush.xpose.msra.mxu0 0.0
        %1220 = vmatpush.xpose.msra.mxu0 0.0
        %1221 = vmatpush.xpose.msra.mxu0 0.0
        %1222 = vmatpush.xpose.msra.mxu0 0.0
        %1223 = vmatpush.xpose.msra.mxu0 0.0
        %1224 = vmatpush.xpose.msra.mxu0 0.0
        %1225 = vmatpush.xpose.msra.mxu0 0.0
        %1226 = vmatpush.xpose.msra.mxu0 0.0
        %1227 = vmatpush.xpose.msra.mxu0 0.0
        %1228 = vmatpush.xpose.msra.mxu0 0.0
        %1229 = vmatpush.xpose.msra.mxu0 %v1212
        %1230 = vmatmul.f32.gmra.mxu0 %v1210
        %v1231 = vpop.f32.mrf.mxu0
        %v1232 = vadd.f32 0.0, %v1231
        %1233 = vdwg.mxu0
        %v1234 = vsel %vm737, %v1193, 0
        %v1236 = vsel %vm737, %v1200, 0
        %1238 = vmatpush.xpose.msra.mxu0 0.0
        %1239 = vmatpush.xpose.msra.mxu0 0.0
        %1240 = vmatpush.xpose.msra.mxu0 0.0
        %1241 = vmatpush.xpose.msra.mxu0 0.0
        %1242 = vmatpush.xpose.msra.mxu0 0.0
        %1243 = vmatpush.xpose.msra.mxu0 0.0
        %1244 = vmatpush.xpose.msra.mxu0 0.0
        %1245 = vmatpush.xpose.msra.mxu0 0.0
        %1246 = vmatpush.xpose.msra.mxu0 0.0
        %1247 = vmatpush.xpose.msra.mxu0 0.0
        %1248 = vmatpush.xpose.msra.mxu0 0.0
        %1249 = vmatpush.xpose.msra.mxu0 0.0
        %1250 = vmatpush.xpose.msra.mxu0 0.0
        %1251 = vmatpush.xpose.msra.mxu0 0.0
        %1252 = vmatpush.xpose.msra.mxu0 0.0
        %1253 = vmatpush.xpose.msra.mxu0 %v1236
        %1254 = vmatmul.f32.gmra.mxu0 %v1234
        %v1255 = vpop.f32.mrf.mxu0
        %v1256 = vadd.f32 0.0, %v1255
        %1257 = vdwg.mxu0
        %v1258 = vsel %vm737, %v1195, 0
        %v1260 = vsel %vm737, %v1202, 0
        %1262 = vmatpush.xpose.msra.mxu0 0.0
        %1263 = vmatpush.xpose.msra.mxu0 0.0
        %1264 = vmatpush.xpose.msra.mxu0 0.0
        %1265 = vmatpush.xpose.msra.mxu0 0.0
        %1266 = vmatpush.xpose.msra.mxu0 0.0
        %1267 = vmatpush.xpose.msra.mxu0 0.0
        %1268 = vmatpush.xpose.msra.mxu0 0.0
        %1269 = vmatpush.xpose.msra.mxu0 0.0
        %1270 = vmatpush.xpose.msra.mxu0 0.0
        %1271 = vmatpush.xpose.msra.mxu0 0.0
        %1272 = vmatpush.xpose.msra.mxu0 0.0
        %1273 = vmatpush.xpose.msra.mxu0 0.0
        %1274 = vmatpush.xpose.msra.mxu0 0.0
        %1275 = vmatpush.xpose.msra.mxu0 0.0
        %1276 = vmatpush.xpose.msra.mxu0 0.0
        %1277 = vmatpush.xpose.msra.mxu0 %v1260
        %1278 = vmatmul.f32.gmra.mxu0 %v1258
        %v1279 = vpop.f32.mrf.mxu0
        %v1280 = vadd.f32 0.0, %v1279
        %1281 = vdwg.mxu0
        %v1282 = vsel %vm737, %v1197, 0
        %v1284 = vsel %vm737, %v1204, 0
        %1286 = vmatpush.xpose.msra.mxu0 0.0
        %1287 = vmatpush.xpose.msra.mxu0 0.0
        %1288 = vmatpush.xpose.msra.mxu0 0.0
        %1289 = vmatpush.xpose.msra.mxu0 0.0
        %1290 = vmatpush.xpose.msra.mxu0 0.0
        %1291 = vmatpush.xpose.msra.mxu0 0.0
        %1292 = vmatpush.xpose.msra.mxu0 0.0
        %1293 = vmatpush.xpose.msra.mxu0 0.0
        %1294 = vmatpush.xpose.msra.mxu0 0.0
        %1295 = vmatpush.xpose.msra.mxu0 0.0
        %1296 = vmatpush.xpose.msra.mxu0 0.0
        %1297 = vmatpush.xpose.msra.mxu0 0.0
        %1298 = vmatpush.xpose.msra.mxu0 0.0
        %1299 = vmatpush.xpose.msra.mxu0 0.0
        %1300 = vmatpush.xpose.msra.mxu0 0.0
        %1301 = vmatpush.xpose.msra.mxu0 %v1284
        %1302 = vmatmul.f32.gmra.mxu0 %v1282
        %v1303 = vpop.f32.mrf.mxu0
        %v1304 = vadd.f32 0.0, %v1303
        %1305 = vdwg.mxu0
        %v1307 = vperm.slane %v640, 0
        %v1309 = vadd.f32 %v1232, %v1307
        %v1310 = vadd.f32 %v1256, %v1307
        %v1311 = vadd.f32 %v1280, %v1307
        %v1312 = vadd.f32 %v1304, %v1307
        %v1313 = vsel %vm737, %v1309, -inf
        %1314 = vmax.xlane.f32.xlu0 %v1313
        %v1315 = vpop.xlane.xlu0 %1314
        %v1316 = vsel %vm737, %v1310, -inf
        %1317 = vmax.xlane.f32.xlu0 %v1316
        %v1318 = vpop.xlane.xlu0 %1317
        %v1319 = vsel %vm737, %v1311, -inf
        %1320 = vmax.xlane.f32.xlu0 %v1319
        %v1321 = vpop.xlane.xlu0 %1320
        %v1322 = vsel %vm737, %v1312, -inf
        %1323 = vmax.xlane.f32.xlu0 %v1322
        %v1324 = vpop.xlane.xlu0 %1323
        %v1325 = vsub.f32 %v1309, %v1315
        %v1326 = vsub.f32 %v1310, %v1318
        %v1327 = vsub.f32 %v1311, %v1321
        %v1328 = vsub.f32 %v1312, %v1324
        %v1329 = vmul.f32 %v1325, 1.442695
        %v1330 = vpow.pop %v1329
        %v1331 = vmul.f32 %v1326, 1.442695
        %v1332 = vpow.pop %v1331
        %v1333 = vmul.f32 %v1327, 1.442695
        %v1334 = vpow.pop %v1333
        %v1335 = vmul.f32 %v1328, 1.442695
        %v1336 = vpow.pop %v1335
        %v1337 = vsel %vm737, %v1330, 0.0
        %1338 = vadd.xlane.f32.xlu0 %v1337
        %v1339 = vpop.xlane.xlu0 %1338
        %v1340 = vsel %vm737, %v1332, 0.0
        %1341 = vadd.xlane.f32.xlu0 %v1340
        %v1342 = vpop.xlane.xlu0 %1341
        %v1343 = vsel %vm737, %v1334, 0.0
        %1344 = vadd.xlane.f32.xlu0 %v1343
        %v1345 = vpop.xlane.xlu0 %1344
        %v1346 = vsel %vm737, %v1336, 0.0
        %1347 = vadd.xlane.f32.xlu0 %v1346
        %v1348 = vpop.xlane.xlu0 %1347
        %v1349 = vrcp.pop %v1339
        %v1350 = vrcp.pop %v1342
        %v1351 = vrcp.pop %v1345
        %v1352 = vrcp.pop %v1348
        %v1353 = vmul.f32 %v1330, %v1349
        %v1354 = vmul.f32 %v1332, %v1350
        %v1355 = vmul.f32 %v1334, %v1351
        %v1356 = vmul.f32 %v1336, %v1352
        %1357 = vrot.lane.b32.xlu0 %v1189, 96
        %v1358 = vpop.permute.xlu0 %1357
        %v1361 = vsel %vm737, %v1353, 0
        %1363 = vmatpush.msra.mxu0 0.0
        %1364 = vmatpush.msra.mxu0 0.0
        %1365 = vmatpush.msra.mxu0 0.0
        %1366 = vmatpush.msra.mxu0 0.0
        %1367 = vmatpush.msra.mxu0 0.0
        %1368 = vmatpush.msra.mxu0 0.0
        %1369 = vmatpush.msra.mxu0 0.0
        %1370 = vmatpush.msra.mxu0 0.0
        %1371 = vmatpush.msra.mxu0 0.0
        %1372 = vmatpush.msra.mxu0 0.0
        %1373 = vmatpush.msra.mxu0 0.0
        %1374 = vmatpush.msra.mxu0 0.0
        %1375 = vmatpush.msra.mxu0 0.0
        %1376 = vmatpush.msra.mxu0 0.0
        %1377 = vmatpush.msra.mxu0 0.0
        %1378 = vmatpush.msra.mxu0 %v1358
        %1379 = vmatmul.f32.gmra.mxu0 %v1361
        %v1380 = vpop.f32.mrf.mxu0
        %v1381 = vadd.f32 0.0, %v1380
        %1382 = vdwg.mxu0
        %1383 = vrot.lane.b32.xlu0 %v1200, 96
        %v1384 = vpop.permute.xlu0 %1383
        %v1387 = vsel %vm737, %v1354, 0
        %1389 = vmatpush.msra.mxu0 0.0
        %1390 = vmatpush.msra.mxu0 0.0
        %1391 = vmatpush.msra.mxu0 0.0
        %1392 = vmatpush.msra.mxu0 0.0
        %1393 = vmatpush.msra.mxu0 0.0
        %1394 = vmatpush.msra.mxu0 0.0
        %1395 = vmatpush.msra.mxu0 0.0
        %1396 = vmatpush.msra.mxu0 0.0
        %1397 = vmatpush.msra.mxu0 0.0
        %1398 = vmatpush.msra.mxu0 0.0
        %1399 = vmatpush.msra.mxu0 0.0
        %1400 = vmatpush.msra.mxu0 0.0
        %1401 = vmatpush.msra.mxu0 0.0
        %1402 = vmatpush.msra.mxu0 0.0
        %1403 = vmatpush.msra.mxu0 0.0
        %1404 = vmatpush.msra.mxu0 %v1384
        %1405 = vmatmul.f32.gmra.mxu0 %v1387
        %v1406 = vpop.f32.mrf.mxu0
        %v1407 = vadd.f32 0.0, %v1406
        %1408 = vdwg.mxu0
        %1409 = vrot.lane.b32.xlu0 %v1202, 96
        %v1410 = vpop.permute.xlu0 %1409
        %v1413 = vsel %vm737, %v1355, 0
        %1415 = vmatpush.msra.mxu0 0.0
        %1416 = vmatpush.msra.mxu0 0.0
        %1417 = vmatpush.msra.mxu0 0.0
        %1418 = vmatpush.msra.mxu0 0.0
        %1419 = vmatpush.msra.mxu0 0.0
        %1420 = vmatpush.msra.mxu0 0.0
        %1421 = vmatpush.msra.mxu0 0.0
        %1422 = vmatpush.msra.mxu0 0.0
        %1423 = vmatpush.msra.mxu0 0.0
        %1424 = vmatpush.msra.mxu0 0.0
        %1425 = vmatpush.msra.mxu0 0.0
        %1426 = vmatpush.msra.mxu0 0.0
        %1427 = vmatpush.msra.mxu0 0.0
        %1428 = vmatpush.msra.mxu0 0.0
        %1429 = vmatpush.msra.mxu0 0.0
        %1430 = vmatpush.msra.mxu0 %v1410
        %1431 = vmatmul.f32.gmra.mxu0 %v1413
        %v1432 = vpop.f32.mrf.mxu0
        %v1433 = vadd.f32 0.0, %v1432
        %1434 = vdwg.mxu0
        %1435 = vrot.lane.b32.xlu0 %v1204, 96
        %v1436 = vpop.permute.xlu0 %1435
        %v1439 = vsel %vm737, %v1356, 0
        %1441 = vmatpush.msra.mxu0 0.0
        %1442 = vmatpush.msra.mxu0 0.0
        %1443 = vmatpush.msra.mxu0 0.0
        %1444 = vmatpush.msra.mxu0 0.0
        %1445 = vmatpush.msra.mxu0 0.0
        %1446 = vmatpush.msra.mxu0 0.0
        %1447 = vmatpush.msra.mxu0 0.0
        %1448 = vmatpush.msra.mxu0 0.0
        %1449 = vmatpush.msra.mxu0 0.0
        %1450 = vmatpush.msra.mxu0 0.0
        %1451 = vmatpush.msra.mxu0 0.0
        %1452 = vmatpush.msra.mxu0 0.0
        %1453 = vmatpush.msra.mxu0 0.0
        %1454 = vmatpush.msra.mxu0 0.0
        %1455 = vmatpush.msra.mxu0 0.0
        %1456 = vmatpush.msra.mxu0 %v1436
        %1457 = vmatmul.f32.gmra.mxu0 %v1439
        %v1458 = vpop.f32.mrf.mxu0
        %v1459 = vadd.f32 0.0, %v1458
        %1460 = vdwg.mxu0
        %v1462 = vsel %vm737, %v1381, 0
        %1464 = vmatpush.msra.mxu0 0.0
        %1465 = vmatpush.msra.mxu0 0.0
        %1466 = vmatpush.msra.mxu0 0.0
        %1467 = vmatpush.msra.mxu0 0.0
        %1468 = vmatpush.msra.mxu0 0.0
        %1469 = vmatpush.msra.mxu0 0.0
        %1470 = vmatpush.msra.mxu0 0.0
        %1471 = vmatpush.msra.mxu0 0.0
        %1472 = vmatpush.msra.mxu0 0.0
        %1473 = vmatpush.msra.mxu0 0.0
        %1474 = vmatpush.msra.mxu0 0.0
        %1475 = vmatpush.msra.mxu0 0.0
        %1476 = vmatpush.msra.mxu0 0.0
        %1477 = vmatpush.msra.mxu0 0.0
        %1478 = vmatpush.msra.mxu0 0.0
        %1479 = vmatpush.msra.mxu0 %v1206
        %1480 = vmatmul.f32.gmra.mxu0 %v1462
        %v1481 = vpop.f32.mrf.mxu0
        %v1482 = vadd.f32 0.0, %v1481
        %1483 = vdwg.mxu0
        %v1485 = vsel %vm737, %v1407, 0
        %1487 = vmatpush.msra.mxu0 0.0
        %1488 = vmatpush.msra.mxu0 0.0
        %1489 = vmatpush.msra.mxu0 0.0
        %1490 = vmatpush.msra.mxu0 0.0
        %1491 = vmatpush.msra.mxu0 0.0
        %1492 = vmatpush.msra.mxu0 0.0
        %1493 = vmatpush.msra.mxu0 0.0
        %1494 = vmatpush.msra.mxu0 0.0
        %1495 = vmatpush.msra.mxu0 0.0
        %1496 = vmatpush.msra.mxu0 0.0
        %1497 = vmatpush.msra.mxu0 0.0
        %1498 = vmatpush.msra.mxu0 0.0
        %1499 = vmatpush.msra.mxu0 0.0
        %1500 = vmatpush.msra.mxu0 0.0
        %1501 = vmatpush.msra.mxu0 0.0
        %1502 = vmatpush.msra.mxu0 %v1207
        %1503 = vmatmul.f32.gmra.mxu0 %v1485
        %v1504 = vpop.f32.mrf.mxu0
        %v1505 = vadd.f32 0.0, %v1504
        %1506 = vdwg.mxu0
        %v1508 = vsel %vm737, %v1433, 0
        %1510 = vmatpush.msra.mxu0 0.0
        %1511 = vmatpush.msra.mxu0 0.0
        %1512 = vmatpush.msra.mxu0 0.0
        %1513 = vmatpush.msra.mxu0 0.0
        %1514 = vmatpush.msra.mxu0 0.0
        %1515 = vmatpush.msra.mxu0 0.0
        %1516 = vmatpush.msra.mxu0 0.0
        %1517 = vmatpush.msra.mxu0 0.0
        %1518 = vmatpush.msra.mxu0 0.0
        %1519 = vmatpush.msra.mxu0 0.0
        %1520 = vmatpush.msra.mxu0 0.0
        %1521 = vmatpush.msra.mxu0 0.0
        %1522 = vmatpush.msra.mxu0 0.0
        %1523 = vmatpush.msra.mxu0 0.0
        %1524 = vmatpush.msra.mxu0 0.0
        %1525 = vmatpush.msra.mxu0 %v1208
        %1526 = vmatmul.f32.gmra.mxu0 %v1508
        %v1527 = vpop.f32.mrf.mxu0
        %v1528 = vadd.f32 0.0, %v1527
        %1529 = vdwg.mxu0
        %v1531 = vsel %vm737, %v1459, 0
        %1533 = vmatpush.msra.mxu0 0.0
        %1534 = vmatpush.msra.mxu0 0.0
        %1535 = vmatpush.msra.mxu0 0.0
        %1536 = vmatpush.msra.mxu0 0.0
        %1537 = vmatpush.msra.mxu0 0.0
        %1538 = vmatpush.msra.mxu0 0.0
        %1539 = vmatpush.msra.mxu0 0.0
        %1540 = vmatpush.msra.mxu0 0.0
        %1541 = vmatpush.msra.mxu0 0.0
        %1542 = vmatpush.msra.mxu0 0.0
        %1543 = vmatpush.msra.mxu0 0.0
        %1544 = vmatpush.msra.mxu0 0.0
        %1545 = vmatpush.msra.mxu0 0.0
        %1546 = vmatpush.msra.mxu0 0.0
        %1547 = vmatpush.msra.mxu0 0.0
        %1548 = vmatpush.msra.mxu0 %v1209
        %1549 = vmatmul.f32.gmra.mxu0 %v1531
        %v1550 = vpop.f32.mrf.mxu0
        %v1551 = vadd.f32 0.0, %v1550
        %1552 = vdwg.mxu0
        %v1553 = vadd.f32 %v1482, %v1505
        %v1554 = vadd.f32 %v1553, %v1528
        %v1555 = vadd.f32 %v1554, %v1551
        %v1556 = vperm.slane %v641, 7
        %v1557 = vadd.f32 %v1555, %v1556
        %v1558 = vadd.f32 %v1089, %v1557
        %v1559 = vsel %vm643, %v1558, 0.0
        %1560 = vadd.xlane.f32.xlu0 %v1559
        %v1561 = vpop.xlane.xlu0 %1560
        %v1562 = vmul.f32 %v1561, %v653
        %v1563 = vsub.f32 %v1558, %v1562
        %v1564 = vmul.f32 %v1563, %v1563
        %v1565 = vsel %vm643, %v1564, 0.0
        %1566 = vadd.xlane.f32.xlu0 %v1565
        %v1567 = vpop.xlane.xlu0 %1566
        %v1568 = vmul.f32 %v1567, 0.032258064
        %v1569 = vrsqrt.pop %v1568
        %v1570 = vmul.f32 %v1569, %v1568
        %v1571 = vmul.f32 %v1570, %v1569
        %v1572 = vmul.f32 0.5, %v1571
        %v1573 = vsub.f32 1.5, %v1572
        %v1574 = vmul.f32 %v1569, %v1573
        %v1575 = vmul.f32 %v1568, %v1574
        %vm1576 = vcmp.eq.f32.partialorder %v1568, inf
        %v1577 = vsel %vm1576, %v1568, %v1575
        %vm1578 = vcmp.eq.f32.partialorder %v1568, 0.0
        %v1579 = vand.u32 %v1568, 2147483648
        %v1580 = vsel %vm1578, %v1579, %v1577
        %v1581 = vadd.f32 %v1580, 1e-06
        %v1582 = vrcp.pop %v1581
        %v1583 = vmul.f32 %v1581, %v1582
        %v1584 = vsub.f32 1.0, %v1583
        %v1585 = vmul.f32 %v1582, %v1584
        %v1586 = vadd.f32 %v1582, %v1585
        %vm1587 = vweird.f32 %v1581
        %vm1588 = vweird.f32 %v1582
        %vm1589 = vmor %vm1587, %vm1588
        %v1590 = vsel %vm1589, %v1582, %v1586
        %v1591 = vand.u32 2147483647, %v1581
        %vm1592 = vcmp.eq.f32.partialorder %v1591, 8.507059e+37
        %v1593 = vand.u32 %v1581, 2147483648
        %v1594 = vor.u32 1.1754944e-38, %v1593
        %v1595 = vsel %vm1592, %v1594, %v1590
        %v1596 = vmul.f32 %v1563, %v1595
        %v1597 = vperm.slane %v641, 4
        %v1598 = vmul.f32 %v1597, %v1596
        %v1599 = vperm.slane %v641, 5
        %v1600 = vadd.f32 %v1598, %v1599
        %v1601 = vld [vmem:[#allocation13] sm:$0xff]
        %v1602 = vld [vmem:[#allocation13 + $0x8] sm:$0xff]
        %v1603 = vld [vmem:[#allocation13 + $0x10] sm:$0xff]
        %v1604 = vld [vmem:[#allocation13 + $0x18] sm:$0xff]
        %v1605 = vld [vmem:[%s12] sm:$0x1]
        %v1607 = vperm.slane %v1605, 0
        %v1610 = vsel %vm643, %v1600, 0
        %1612 = vmatpush.msra.mxu0 0.0
        %1613 = vmatpush.msra.mxu0 0.0
        %1614 = vmatpush.msra.mxu0 0.0
        %1615 = vmatpush.msra.mxu0 0.0
        %1616 = vmatpush.msra.mxu0 0.0
        %1617 = vmatpush.msra.mxu0 0.0
        %1618 = vmatpush.msra.mxu0 0.0
        %1619 = vmatpush.msra.mxu0 0.0
        %1620 = vmatpush.msra.mxu0 0.0
        %1621 = vmatpush.msra.mxu0 0.0
        %1622 = vmatpush.msra.mxu0 0.0
        %1623 = vmatpush.msra.mxu0 0.0
        %1624 = vmatpush.msra.mxu0 %v1604
        %1625 = vmatpush.msra.mxu0 %v1603
        %1626 = vmatpush.msra.mxu0 %v1602
        %1627 = vmatpush.msra.mxu0 %v1601
        %1628 = vmatmul.f32.gmra.mxu0 %v1610
        %v1629 = vpop.f32.mrf.mxu0
        %v1630 = vadd.f32 %v1607, %v1629
        %1631 = vdwg.mxu0
        %v1632 = vmax.f32 %v1630, 0.0
        %v1633 = vld [vmem:[%s13] sm:$0xff]
        %v1634 = vld [vmem:[%s13 + $0x8] sm:$0xff]
        %v1635 = vld [vmem:[%s13 + $0x10] sm:$0xff]
        %v1636 = vld [vmem:[%s13 + $0x18] sm:$0xff]
        %v1637 = vld [vmem:[%s13 + $0x20] sm:$0xff]
        %v1638 = vld [vmem:[%s13 + $0x28] sm:$0xff]
        %v1639 = vld [vmem:[%s13 + $0x30] sm:$0xff]
        %v1640 = vld [vmem:[%s13 + $0x38] sm:$0xff]
        %vm1641 = vcmask 523264
        %v1643 = vsel %vm1641, %v1632, 0
        %1645 = vmatpush.msra.mxu0 0.0
        %1646 = vmatpush.msra.mxu0 0.0
        %1647 = vmatpush.msra.mxu0 0.0
        %1648 = vmatpush.msra.mxu0 0.0
        %1649 = vmatpush.msra.mxu0 0.0
        %1650 = vmatpush.msra.mxu0 0.0
        %1651 = vmatpush.msra.mxu0 0.0
        %1652 = vmatpush.msra.mxu0 0.0
        %1653 = vmatpush.msra.mxu0 %v1640
        %1654 = vmatpush.msra.mxu0 %v1639
        %1655 = vmatpush.msra.mxu0 %v1638
        %1656 = vmatpush.msra.mxu0 %v1637
        %1657 = vmatpush.msra.mxu0 %v1636
        %1658 = vmatpush.msra.mxu0 %v1635
        %1659 = vmatpush.msra.mxu0 %v1634
        %1660 = vmatpush.msra.mxu0 %v1633
        %1661 = vmatmul.f32.gmra.mxu0 %v1643
        %v1662 = vpop.f32.mrf.mxu0
        %v1663 = vadd.f32 0.0, %v1662
        %1664 = vdwg.mxu0
        %v1665 = vadd.f32 %v1558, %v1663
        %v1666 = vperm.slane %v642, 0
        %v1667 = vadd.f32 %v1665, %v1666
        %1668 = vst.msk [vmem:[%s629] sm:$0xff] %vm643, %v1667
        %s1669 = sand.u32 %s358, 1
        %s1670 = scalar_lea.sflag [#allocation4], %s1669
        %s1671 = sand.u32 %s358, 1
        %s1672 = smul.addr %s1671, 8
        %s1673 = scalar_lea.vmem [#allocation14], %s1672
        // Predicated region
        $region105: #{tpu_custom_call.1} parent=75 // pred_check
          %p1674 = pneg %p368
        $region106: #{tpu_custom_call.1} parent=75 // pred_check_branch
          %1676 = sbr.rel (%p1674) target = $region108
        $region107: #{tpu_custom_call.1} parent=75 // pred_region
          %1678 = vsyncadd %s1670, 0
          %s1679 = smul.addr %s36, 8
          %s1680 = scalar_lea.hbm %s14, %s1679
          %s1682 = sshll.u32 %s1673, 4
          %s1683 = int_to_ptr.vmem [resolvable:$true] %s1682
          %s1684 = sshll.u32 %s1680, 4
          %s1685 = int_to_ptr.hbm [resolvable:$true] %s1684
          %1687 = dma.vmem_to_hbm [thread:$0]  %s1683, 128, %s1685, %s1670
        $region108: #{tpu_custom_call.1} parent=75 // pred_fallthru
          _
      $region76: #{tpu_custom_call.1} parent=5 // pred_fallthru
        _
      %p1688 = scmp.le.s32.totalorder 2, %s31
      // Predicated region
      $region109: #{tpu_custom_call.1} parent=5 // pred_check
        %p1689 = pneg %p1688
      $region110: #{tpu_custom_call.1} parent=5 // pred_check_branch
        %1691 = sbr.rel (%p1689) target = $region112
      $region111: #{tpu_custom_call.1} parent=5 // pred_region
        %s1692 = ssub.s32 %s31, 2
        // Predicated region
        $region113: #{tpu_custom_call.1} parent=111 // pred_check
          %p1693 = pneg %p374
        $region114: #{tpu_custom_call.1} parent=111 // pred_check_branch
          %1695 = sbr.rel (%p1693) target = $region116
        $region115: #{tpu_custom_call.1} parent=111 // pred_region
          %s1696 = sand.u32 %s359, 1
          %s1697 = scalar_lea.sflag [#allocation4], %s1696
          %s1698 = sand.u32 %s359, 1
          %s1699 = smul.addr %s1698, 8
          %s1700 = scalar_lea.vmem [#allocation14], %s1699
          %1702 = dma.done %s1697, 128
        $region116: #{tpu_custom_call.1} parent=111 // pred_fallthru
          _
      $region112: #{tpu_custom_call.1} parent=5 // pred_fallthru
        _
    $region6: #{tpu_custom_call.1} parent=1 // loop_footer
      %s35 = sadd.s32 1, %s31
    $region7: #{tpu_custom_call.1} parent=1 // loop_footer_branch
      %30 = sbr.rel target = $region3
    $region8: #{tpu_custom_call.1} parent=1 // loop_exit
      _
    %1703 = vsyncpa [#allocation3], 1
    %s1704 = scalar_lea.sflag [#allocation3], 1
    %1705 = vsyncpa %s1704, 1
    %1706 = vsyncpa [#allocation6], 1
    %s1707 = scalar_lea.sflag [#allocation6], 1
    %1708 = vsyncpa %s1707, 1
    %1709 = vsyncpa [#allocation9], 1
    %1710 = vsyncpa [#allocation12], 1
    %1711 = vsyncpa [#allocation4], 1
    %s1712 = scalar_lea.sflag [#allocation4], 1
    %1713 = vsyncpa %s1712, 1

</llo_original>
